<compile_context>
chip_gen: v6e
topology: v6e:2x2x1
jax: 0.10.0
libtpu: 0.0.40
codegen_flags: <defaults>
</compile_context>

<pallas_src>
import functools

import jax
import jax.numpy as jnp
from jax import lax
from jax.experimental import pallas as pl
from jax.experimental.pallas import tpu as pltpu

INPUT_DIM = 28
HIDDEN_DIM = 100
LAYER_DIM = 2          # hard-wired: two stacked RNN layers (matches the module)
OUTPUT_DIM = 10

HP = 128               # lane-padded hidden dim   100 -> 128
OP = 128               # lane-padded fc output dim 10 -> 128

DEFAULT_MAX_TIME_CHUNK = 256
DEFAULT_UNROLL = 8


def _rnn_kernel(u0_ref,     # (TC, B, HP) f32: precomputed x@W_ih0^T + b0, time-major
                whh0_ref,   # (HP, HP)  compute dtype, zero-padded W_hh0^T
                wih1_ref,   # (HP, HP)  compute dtype, zero-padded W_ih1^T
                whh1_ref,   # (HP, HP)  compute dtype, zero-padded W_hh1^T
                b1_ref,     # (1, HP)   f32, b_ih1 + b_hh1, zero-padded
                wfc_ref,    # (HP, OP)  compute dtype, zero-padded fc weight^T
                bfc_ref,    # (1, OP)   f32, zero-padded fc bias
                out_ref,    # (B, OP)   f32
                h0_scr,     # VMEM (B, HP) f32 — layer-0 carry across grid steps
                h1_scr,     # VMEM (B, HP) f32 — layer-1 carry across grid steps
                *, seq_len, needs_mask, unroll):
    TC, B, _ = u0_ref.shape
    chunk = pl.program_id(0)

    # Zero the recurrent state once, on the first time chunk.
    @pl.when(chunk == 0)
    def _init():
        h0_scr[...] = jnp.zeros_like(h0_scr)
        h1_scr[...] = jnp.zeros_like(h1_scr)

    # Hoist the bias broadcast out of the time loop (JAX does not CSE broadcasts).
    b1 = jnp.broadcast_to(b1_ref[...], (B, HP))
    cdt = whh0_ref.dtype
    t_base = chunk * TC

    def step(t, carry):
        h0, h1 = carry                                   # f32 (B, HP) in vregs
        u0_t = u0_ref[t]                                 # (B, HP) precomputed term
        # layer 0: only the recurrent product is on the serial chain (K=128)
        h0n = jnp.maximum(
            u0_t + jnp.dot(h0.astype(cdt), whh0_ref[...],
                           preferred_element_type=jnp.float32),
            0.0)
        # layer 1: two independent K=128 products (pipeline in the MXU), no concat
        h1n = jnp.maximum(
            jnp.dot(h0n.astype(cdt), wih1_ref[...],
                    preferred_element_type=jnp.float32)
            + jnp.dot(h1.astype(cdt), whh1_ref[...],
                      preferred_element_type=jnp.float32)
            + b1,
            0.0)
        if needs_mask:                                   # static Python flag
            valid = (t_base + t) < seq_len               # freeze h on padded tail
            h0n = jnp.where(valid, h0n, h0)
            h1n = jnp.where(valid, h1n, h1)
        return (h0n, h1n)

    # Hidden state stays in vregs through the (partially unrolled) in-chunk loop;
    # padded lanes 100:128 stay exactly 0 (zero-padded weights/bias, relu(0)=0).
    h0, h1 = lax.fori_loop(0, TC, step, (h0_scr[...], h1_scr[...]),
                           unroll=unroll)

    # Persist the recurrence for the next grid step (next time chunk).
    h0_scr[...] = h0
    h1_scr[...] = h1

    # Final Linear on the last timestep's top-layer hidden state (lane-dense store).
    @pl.when(chunk == pl.num_programs(0) - 1)
    def _finalize():
        out_ref[...] = (
            jnp.dot(h1.astype(wfc_ref.dtype), wfc_ref[...],
                    preferred_element_type=jnp.float32)
            + bfc_ref[...])


def rnn_model_forward(x, params, *, time_chunk=None,
                      compute_dtype=jnp.bfloat16, unroll=DEFAULT_UNROLL):
    """x: (B, T, D) float32 (PyTorch batch_first convention)."""
    B, T, D = x.shape
    H, O = HIDDEN_DIM, OUTPUT_DIM
    assert D == INPUT_DIM

    TC = min(T, DEFAULT_MAX_TIME_CHUNK) if time_chunk is None else min(time_chunk, T)
    n_chunks = -(-T // TC)                 # cdiv grid; no divisor search
    Tp = n_chunks * TC
    needs_mask = (Tp != T)
    unroll_eff = max(1, min(unroll, TC))

    f32 = jnp.float32
    cdt = compute_dtype

    # ---- Hoisted layer-0 input projection (independent of the recurrence) ----
    # One big batched XLA matmul; output already time-major and lane-padded.
    w_ih0 = params["w_ih0"].astype(f32)                       # (H, D)
    bias0 = (params["b_ih0"] + params["b_hh0"]).astype(f32)   # (H,)
    u0 = jnp.einsum("btd,hd->tbh", x.astype(f32), w_ih0,
                    precision=lax.Precision.HIGHEST) + bias0   # (T, B, H)
    u0 = jnp.pad(u0, ((0, Tp - T), (0, 0), (0, HP - H)))       # (Tp, B, HP)

    # Zero-padded, transposed weights (padded rows/cols/lanes exactly zero so the
    # padded hidden lanes stay 0 through relu; results are unchanged).
    def pad_hh(w):  # torch-layout (H, H) -> (HP, HP) = padded W^T, compute dtype
        return jnp.zeros((HP, HP), f32).at[:H, :H].set(w.T.astype(f32)).astype(cdt)

    whh0 = pad_hh(params["w_hh0"])
    wih1 = pad_hh(params["w_ih1"])
    whh1 = pad_hh(params["w_hh1"])
    b1 = jnp.zeros((1, HP), f32).at[0, :H].set(
        (params["b_ih1"] + params["b_hh1"]).astype(f32))
    wfc = jnp.zeros((HP, OP), f32).at[:H, :O].set(
        params["w_fc"].T.astype(f32)).astype(cdt)
    bfc = jnp.zeros((1, OP), f32).at[0, :O].set(params["b_fc"].astype(f32))

    kernel = functools.partial(_rnn_kernel, seq_len=T, needs_mask=needs_mask,
                               unroll=unroll_eff)

    out_padded = pl.pallas_call(
        kernel,
        out_shape=jax.ShapeDtypeStruct((B, OP), jnp.float32),
        grid_spec=pltpu.PrefetchScalarGridSpec(
            num_scalar_prefetch=0,
            grid=(n_chunks,),
            in_specs=[
                # U0: pipelined over time chunks (double-buffered DMA).
                pl.BlockSpec((TC, B, HP), lambda t: (t, 0, 0)),
                # Weights / biases: constant block index -> fetched once, resident.
                pl.BlockSpec((HP, HP), lambda t: (0, 0)),
                pl.BlockSpec((HP, HP), lambda t: (0, 0)),
                pl.BlockSpec((HP, HP), lambda t: (0, 0)),
                pl.BlockSpec((1, HP), lambda t: (0, 0)),
                pl.BlockSpec((HP, OP), lambda t: (0, 0)),
                pl.BlockSpec((1, OP), lambda t: (0, 0)),
            ],
            out_specs=pl.BlockSpec((B, OP), lambda t: (0, 0)),
            scratch_shapes=[
                pltpu.VMEM((B, HP), jnp.float32),   # h0 carry across chunks
                pltpu.VMEM((B, HP), jnp.float32),   # h1 carry across chunks
            ],
        ),
        compiler_params=pltpu.CompilerParams(
            dimension_semantics=("arbitrary",),      # time recurrence is sequential
        ),
    )(u0, whh0, wih1, whh1, b1, wfc, bfc)

    return out_padded[:, :O]


def init_params(key):
    """Deterministic synthetic parameters with PyTorch nn.RNN/Linear shapes."""
    H, D, O = HIDDEN_DIM, INPUT_DIM, OUTPUT_DIM
    ks = jax.random.split(key, 10)
    bound = 1.0 / jnp.sqrt(H)
    u = lambda k, shape: jax.random.uniform(
        k, shape, jnp.float32, minval=-bound, maxval=bound)
    return {
        "w_ih0": u(ks[0], (H, D)),
        "w_hh0": u(ks[1], (H, H)),
        "b_ih0": u(ks[2], (H,)),
        "b_hh0": u(ks[3], (H,)),
        "w_ih1": u(ks[4], (H, H)),
        "w_hh1": u(ks[5], (H, H)),
        "b_ih1": u(ks[6], (H,)),
        "b_hh1": u(ks[7], (H,)),
        "w_fc": u(ks[8], (O, H)),
        "b_fc": u(ks[9], (O,)),
    }


def rnn_model_reference(x, p):
    """Pure-JAX reference matching PyTorch nn.RNN(relu) + Linear semantics."""
    B, T, D = x.shape
    h0 = jnp.zeros((B, HIDDEN_DIM), jnp.float32)
    h1 = jnp.zeros((B, HIDDEN_DIM), jnp.float32)

    def step(carry, xt):
        h0, h1 = carry
        h0 = jax.nn.relu(xt @ p["w_ih0"].T + p["b_ih0"]
                         + h0 @ p["w_hh0"].T + p["b_hh0"])
        h1 = jax.nn.relu(h0 @ p["w_ih1"].T + p["b_ih1"]
                         + h1 @ p["w_hh1"].T + p["b_hh1"])
        return (h0, h1), None

    (h0, h1), _ = lax.scan(step, (h0, h1), jnp.transpose(x, (1, 0, 2)))
    return h1 @ p["w_fc"].T + p["b_fc"]


if __name__ == "__main__":
    key = jax.random.PRNGKey(0)
    kx, kp = jax.random.split(key)

    B, T = 2, 8
    x = jax.random.normal(kx, (B, T, INPUT_DIM), jnp.float32)
    params = init_params(kp)

    ref = rnn_model_reference(x, params)

    # f32-operand path with a ragged time chunking (chunks of 3 over T=8) to
    # exercise the cross-chunk hidden-state carry and the tail mask: tight parity.
    out_f32 = jax.block_until_ready(
        rnn_model_forward(x, params, time_chunk=3, compute_dtype=jnp.float32))
    assert out_f32.shape == (B, OUTPUT_DIM)
    assert jnp.allclose(out_f32, ref, atol=1e-4, rtol=1e-4), "f32 kernel mismatch"

    # Default path: bf16 MXU operands (v5e/v6e/v7x native), f32 accumulation,
    # single time chunk.  bf16 operands change numerics slightly (flagged in the
    # review), so the tolerance is relaxed for this path only.
    out = jax.block_until_ready(rnn_model_forward(x, params))
    assert out.shape == (B, OUTPUT_DIM)
    assert jnp.allclose(out, ref, atol=2e-2, rtol=2e-2), "bf16 kernel mismatch"

    print("KERNEL_OK")
</pallas_src>

<mosaic_0001>
module attributes {stable_mosaic.version = 11 : i64} {
  func.func @_rnn_kernel(%arg0: i32, %arg1: memref<3x2x128xf32, #tpu.memory_space<vmem>>, %arg2: memref<128x128xf32, #tpu.memory_space<vmem>>, %arg3: memref<128x128xf32, #tpu.memory_space<vmem>>, %arg4: memref<128x128xf32, #tpu.memory_space<vmem>>, %arg5: memref<1x128xf32, #tpu.memory_space<vmem>>, %arg6: memref<128x128xf32, #tpu.memory_space<vmem>>, %arg7: memref<1x128xf32, #tpu.memory_space<vmem>>, %arg8: memref<2x128xf32, #tpu.memory_space<vmem>>, %arg9: memref<2x128xf32, #tpu.memory_space<vmem>>, %arg10: memref<2x128xf32, #tpu.memory_space<vmem>>) attributes {dimension_semantics = [#tpu.dimension_semantics<arbitrary>], iteration_bounds = array<i64: 3>, scalar_prefetch = 0 : i64, scratch_operands = 2 : i64, tpu.core_type = #tpu.core_type<tc>, window_params = [{transform_indices = @transform_0, window_bounds = array<i64: 3, 2, 128>}, {pipeline_mode = #tpu.pipeline_mode<synchronous>, transform_indices = @transform_1, window_bounds = array<i64: 128, 128>}, {pipeline_mode = #tpu.pipeline_mode<synchronous>, transform_indices = @transform_2, window_bounds = array<i64: 128, 128>}, {pipeline_mode = #tpu.pipeline_mode<synchronous>, transform_indices = @transform_3, window_bounds = array<i64: 128, 128>}, {pipeline_mode = #tpu.pipeline_mode<synchronous>, transform_indices = @transform_4, window_bounds = array<i64: 1, 128>}, {pipeline_mode = #tpu.pipeline_mode<synchronous>, transform_indices = @transform_5, window_bounds = array<i64: 128, 128>}, {pipeline_mode = #tpu.pipeline_mode<synchronous>, transform_indices = @transform_6, window_bounds = array<i64: 1, 128>}, {pipeline_mode = #tpu.pipeline_mode<synchronous>, transform_indices = @transform_7, window_bounds = array<i64: 2, 128>}]} {
    %c0_i32 = arith.constant 0 : i32
    %0 = arith.cmpi eq, %arg0, %c0_i32 : i32
    %1 = arith.extui %0 : i1 to i32
    %c0_i32_0 = arith.constant 0 : i32
    %2 = arith.cmpi ne, %1, %c0_i32_0 : i32
    scf.if %2 {
      %cst_54 = arith.constant 0.000000e+00 : f32
      %74 = vector.broadcast %cst_54 : f32 to vector<2x128xf32>
      %c0_55 = arith.constant 0 : index
      %c0_56 = arith.constant 0 : index
      %75 = vector.load %arg9[%c0_55, %c0_56] : memref<2x128xf32, #tpu.memory_space<vmem>>, vector<2x128xf32>
      tpu.vector_store %arg9[%c0_55, %c0_56], %74 {strides = array<i32>} : memref<2x128xf32, #tpu.memory_space<vmem>>, vector<2x128xf32>,
      %cst_57 = arith.constant 0.000000e+00 : f32
      %76 = vector.broadcast %cst_57 : f32 to vector<2x128xf32>
      %c0_58 = arith.constant 0 : index
      %c0_59 = arith.constant 0 : index
      %77 = vector.load %arg10[%c0_58, %c0_59] : memref<2x128xf32, #tpu.memory_space<vmem>>, vector<2x128xf32>
      tpu.vector_store %arg10[%c0_58, %c0_59], %76 {strides = array<i32>} : memref<2x128xf32, #tpu.memory_space<vmem>>, vector<2x128xf32>,
    } else {
    }
    %c0 = arith.constant 0 : index
    %c0_1 = arith.constant 0 : index
    %3 = vector.load %arg5[%c0, %c0_1] : memref<1x128xf32, #tpu.memory_space<vmem>>, vector<1x128xf32>
    %4 = vector.shape_cast %3 : vector<1x128xf32> to vector<1x128xf32>
    %5 = vector.broadcast %4 : vector<1x128xf32> to vector<2x128xf32>
    %c3_i32 = arith.constant 3 : i32
    %6 = arith.muli %arg0, %c3_i32 : i32
    %c0_2 = arith.constant 0 : index
    %c0_3 = arith.constant 0 : index
    %7 = vector.load %arg9[%c0_2, %c0_3] : memref<2x128xf32, #tpu.memory_space<vmem>>, vector<2x128xf32>
    %c0_4 = arith.constant 0 : index
    %c0_5 = arith.constant 0 : index
    %8 = vector.load %arg10[%c0_4, %c0_5] : memref<2x128xf32, #tpu.memory_space<vmem>>, vector<2x128xf32>
    %c0_i32_6 = arith.constant 0 : i32
    %9 = arith.index_cast %c0_i32_6 : i32 to index
    %c0_7 = arith.constant 0 : index
    %c0_8 = arith.constant 0 : index
    %10 = vector.load %arg1[%9, %c0_7, %c0_8] : memref<3x2x128xf32, #tpu.memory_space<vmem>>, vector<1x2x128xf32>
    %11 = vector.shape_cast %10 : vector<1x2x128xf32> to vector<2x128xf32>
    %c0_9 = arith.constant 0 : index
    %c0_10 = arith.constant 0 : index
    %12 = vector.load %arg2[%c0_9, %c0_10] : memref<128x128xf32, #tpu.memory_space<vmem>>, vector<128x128xf32>
    %cst = arith.constant dense<0.000000e+00> : vector<2x128xf32>
    %13 = tpu.matmul %7, %12, %cst {dimension_numbers = #tpu.dot_dimension_numbers<[1], [0], [0], [1], [0, 0, 1, 1], [], []>} : vector<2x128xf32>, vector<128x128xf32>, vector<2x128xf32> -> vector<2x128xf32>
    %14 = arith.addf %11, %13 : vector<2x128xf32>
    %cst_11 = arith.constant 0.000000e+00 : f32
    %15 = vector.broadcast %cst_11 : f32 to vector<2x128xf32>
    %16 = arith.maximumf %14, %15 : vector<2x128xf32>
    %c0_12 = arith.constant 0 : index
    %c0_13 = arith.constant 0 : index
    %17 = vector.load %arg3[%c0_12, %c0_13] : memref<128x128xf32, #tpu.memory_space<vmem>>, vector<128x128xf32>
    %cst_14 = arith.constant dense<0.000000e+00> : vector<2x128xf32>
    %18 = tpu.matmul %16, %17, %cst_14 {dimension_numbers = #tpu.dot_dimension_numbers<[1], [0], [0], [1], [0, 0, 1, 1], [], []>} : vector<2x128xf32>, vector<128x128xf32>, vector<2x128xf32> -> vector<2x128xf32>
    %c0_15 = arith.constant 0 : index
    %c0_16 = arith.constant 0 : index
    %19 = vector.load %arg4[%c0_15, %c0_16] : memref<128x128xf32, #tpu.memory_space<vmem>>, vector<128x128xf32>
    %cst_17 = arith.constant dense<0.000000e+00> : vector<2x128xf32>
    %20 = tpu.matmul %8, %19, %cst_17 {dimension_numbers = #tpu.dot_dimension_numbers<[1], [0], [0], [1], [0, 0, 1, 1], [], []>} : vector<2x128xf32>, vector<128x128xf32>, vector<2x128xf32> -> vector<2x128xf32>
    %21 = arith.addf %18, %20 : vector<2x128xf32>
    %22 = arith.addf %21, %5 : vector<2x128xf32>
    %cst_18 = arith.constant 0.000000e+00 : f32
    %23 = vector.broadcast %cst_18 : f32 to vector<2x128xf32>
    %24 = arith.maximumf %22, %23 : vector<2x128xf32>
    %25 = arith.addi %6, %c0_i32_6 : i32
    %c8_i32 = arith.constant 8 : i32
    %26 = arith.cmpi slt, %25, %c8_i32 : i32
    %27 = arith.select %26, %16, %7 : vector<2x128xf32>
    %28 = arith.select %26, %24, %8 : vector<2x128xf32>
    %c1_i32 = arith.constant 1 : i32
    %29 = arith.index_cast %c1_i32 : i32 to index
    %c0_19 = arith.constant 0 : index
    %c0_20 = arith.constant 0 : index
    %30 = vector.load %arg1[%29, %c0_19, %c0_20] : memref<3x2x128xf32, #tpu.memory_space<vmem>>, vector<1x2x128xf32>
    %31 = vector.shape_cast %30 : vector<1x2x128xf32> to vector<2x128xf32>
    %c0_21 = arith.constant 0 : index
    %c0_22 = arith.constant 0 : index
    %32 = vector.load %arg2[%c0_21, %c0_22] : memref<128x128xf32, #tpu.memory_space<vmem>>, vector<128x128xf32>
    %cst_23 = arith.constant dense<0.000000e+00> : vector<2x128xf32>
    %33 = tpu.matmul %27, %32, %cst_23 {dimension_numbers = #tpu.dot_dimension_numbers<[1], [0], [0], [1], [0, 0, 1, 1], [], []>} : vector<2x128xf32>, vector<128x128xf32>, vector<2x128xf32> -> vector<2x128xf32>
    %34 = arith.addf %31, %33 : vector<2x128xf32>
    %cst_24 = arith.constant 0.000000e+00 : f32
    %35 = vector.broadcast %cst_24 : f32 to vector<2x128xf32>
    %36 = arith.maximumf %34, %35 : vector<2x128xf32>
    %c0_25 = arith.constant 0 : index
    %c0_26 = arith.constant 0 : index
    %37 = vector.load %arg3[%c0_25, %c0_26] : memref<128x128xf32, #tpu.memory_space<vmem>>, vector<128x128xf32>
    %cst_27 = arith.constant dense<0.000000e+00> : vector<2x128xf32>
    %38 = tpu.matmul %36, %37, %cst_27 {dimension_numbers = #tpu.dot_dimension_numbers<[1], [0], [0], [1], [0, 0, 1, 1], [], []>} : vector<2x128xf32>, vector<128x128xf32>, vector<2x128xf32> -> vector<2x128xf32>
    %c0_28 = arith.constant 0 : index
    %c0_29 = arith.constant 0 : index
    %39 = vector.load %arg4[%c0_28, %c0_29] : memref<128x128xf32, #tpu.memory_space<vmem>>, vector<128x128xf32>
    %cst_30 = arith.constant dense<0.000000e+00> : vector<2x128xf32>
    %40 = tpu.matmul %28, %39, %cst_30 {dimension_numbers = #tpu.dot_dimension_numbers<[1], [0], [0], [1], [0, 0, 1, 1], [], []>} : vector<2x128xf32>, vector<128x128xf32>, vector<2x128xf32> -> vector<2x128xf32>
    %41 = arith.addf %38, %40 : vector<2x128xf32>
    %42 = arith.addf %41, %5 : vector<2x128xf32>
    %cst_31 = arith.constant 0.000000e+00 : f32
    %43 = vector.broadcast %cst_31 : f32 to vector<2x128xf32>
    %44 = arith.maximumf %42, %43 : vector<2x128xf32>
    %45 = arith.addi %6, %c1_i32 : i32
    %c8_i32_32 = arith.constant 8 : i32
    %46 = arith.cmpi slt, %45, %c8_i32_32 : i32
    %47 = arith.select %46, %36, %27 : vector<2x128xf32>
    %48 = arith.select %46, %44, %28 : vector<2x128xf32>
    %c2_i32 = arith.constant 2 : i32
    %49 = arith.index_cast %c2_i32 : i32 to index
    %c0_33 = arith.constant 0 : index
    %c0_34 = arith.constant 0 : index
    %50 = vector.load %arg1[%49, %c0_33, %c0_34] : memref<3x2x128xf32, #tpu.memory_space<vmem>>, vector<1x2x128xf32>
    %51 = vector.shape_cast %50 : vector<1x2x128xf32> to vector<2x128xf32>
    %c0_35 = arith.constant 0 : index
    %c0_36 = arith.constant 0 : index
    %52 = vector.load %arg2[%c0_35, %c0_36] : memref<128x128xf32, #tpu.memory_space<vmem>>, vector<128x128xf32>
    %cst_37 = arith.constant dense<0.000000e+00> : vector<2x128xf32>
    %53 = tpu.matmul %47, %52, %cst_37 {dimension_numbers = #tpu.dot_dimension_numbers<[1], [0], [0], [1], [0, 0, 1, 1], [], []>} : vector<2x128xf32>, vector<128x128xf32>, vector<2x128xf32> -> vector<2x128xf32>
    %54 = arith.addf %51, %53 : vector<2x128xf32>
    %cst_38 = arith.constant 0.000000e+00 : f32
    %55 = vector.broadcast %cst_38 : f32 to vector<2x128xf32>
    %56 = arith.maximumf %54, %55 : vector<2x128xf32>
    %c0_39 = arith.constant 0 : index
    %c0_40 = arith.constant 0 : index
    %57 = vector.load %arg3[%c0_39, %c0_40] : memref<128x128xf32, #tpu.memory_space<vmem>>, vector<128x128xf32>
    %cst_41 = arith.constant dense<0.000000e+00> : vector<2x128xf32>
    %58 = tpu.matmul %56, %57, %cst_41 {dimension_numbers = #tpu.dot_dimension_numbers<[1], [0], [0], [1], [0, 0, 1, 1], [], []>} : vector<2x128xf32>, vector<128x128xf32>, vector<2x128xf32> -> vector<2x128xf32>
    %c0_42 = arith.constant 0 : index
    %c0_43 = arith.constant 0 : index
    %59 = vector.load %arg4[%c0_42, %c0_43] : memref<128x128xf32, #tpu.memory_space<vmem>>, vector<128x128xf32>
    %cst_44 = arith.constant dense<0.000000e+00> : vector<2x128xf32>
    %60 = tpu.matmul %48, %59, %cst_44 {dimension_numbers = #tpu.dot_dimension_numbers<[1], [0], [0], [1], [0, 0, 1, 1], [], []>} : vector<2x128xf32>, vector<128x128xf32>, vector<2x128xf32> -> vector<2x128xf32>
    %61 = arith.addf %58, %60 : vector<2x128xf32>
    %62 = arith.addf %61, %5 : vector<2x128xf32>
    %cst_45 = arith.constant 0.000000e+00 : f32
    %63 = vector.broadcast %cst_45 : f32 to vector<2x128xf32>
    %64 = arith.maximumf %62, %63 : vector<2x128xf32>
    %65 = arith.addi %6, %c2_i32 : i32
    %c8_i32_46 = arith.constant 8 : i32
    %66 = arith.cmpi slt, %65, %c8_i32_46 : i32
    %67 = arith.select %66, %56, %47 : vector<2x128xf32>
    %68 = arith.select %66, %64, %48 : vector<2x128xf32>
    %c3_i32_47 = arith.constant 3 : i32
    %c0_48 = arith.constant 0 : index
    %c0_49 = arith.constant 0 : index
    %69 = vector.load %arg9[%c0_48, %c0_49] : memref<2x128xf32, #tpu.memory_space<vmem>>, vector<2x128xf32>
    tpu.vector_store %arg9[%c0_48, %c0_49], %67 {strides = array<i32>} : memref<2x128xf32, #tpu.memory_space<vmem>>, vector<2x128xf32>,
    %c0_50 = arith.constant 0 : index
    %c0_51 = arith.constant 0 : index
    %70 = vector.load %arg10[%c0_50, %c0_51] : memref<2x128xf32, #tpu.memory_space<vmem>>, vector<2x128xf32>
    tpu.vector_store %arg10[%c0_50, %c0_51], %68 {strides = array<i32>} : memref<2x128xf32, #tpu.memory_space<vmem>>, vector<2x128xf32>,
    %c2_i32_52 = arith.constant 2 : i32
    %71 = arith.cmpi eq, %arg0, %c2_i32_52 : i32
    %72 = arith.extui %71 : i1 to i32
    %c0_i32_53 = arith.constant 0 : i32
    %73 = arith.cmpi ne, %72, %c0_i32_53 : i32
    scf.if %73 {
      %c0_54 = arith.constant 0 : index
      %c0_55 = arith.constant 0 : index
      %74 = vector.load %arg6[%c0_54, %c0_55] : memref<128x128xf32, #tpu.memory_space<vmem>>, vector<128x128xf32>
      %cst_56 = arith.constant dense<0.000000e+00> : vector<2x128xf32>
      %75 = tpu.matmul %68, %74, %cst_56 {dimension_numbers = #tpu.dot_dimension_numbers<[1], [0], [0], [1], [0, 0, 1, 1], [], []>} : vector<2x128xf32>, vector<128x128xf32>, vector<2x128xf32> -> vector<2x128xf32>
      %c0_57 = arith.constant 0 : index
      %c0_58 = arith.constant 0 : index
      %76 = vector.load %arg7[%c0_57, %c0_58] : memref<1x128xf32, #tpu.memory_space<vmem>>, vector<1x128xf32>
      %77 = vector.broadcast %76 : vector<1x128xf32> to vector<2x128xf32>
      %78 = arith.addf %75, %77 : vector<2x128xf32>
      %c0_59 = arith.constant 0 : index
      %c0_60 = arith.constant 0 : index
      %79 = vector.load %arg8[%c0_59, %c0_60] : memref<2x128xf32, #tpu.memory_space<vmem>>, vector<2x128xf32>
      tpu.vector_store %arg8[%c0_59, %c0_60], %78 {strides = array<i32>} : memref<2x128xf32, #tpu.memory_space<vmem>>, vector<2x128xf32>,
    } else {
    }
    return
  }
  func.func @transform_0(%arg0: i32) -> (i32, i32, i32) {
    %c0_i32 = arith.constant 0 : i32
    %c0_i32_0 = arith.constant 0 : i32
    %c0_i32_1 = arith.constant 0 : i32
    return %arg0, %c0_i32, %c0_i32_0 : i32, i32, i32
  }
  func.func @transform_1(%arg0: i32) -> (i32, i32) {
    %c0_i32 = arith.constant 0 : i32
    %c0_i32_0 = arith.constant 0 : i32
    %c0_i32_1 = arith.constant 0 : i32
    return %c0_i32, %c0_i32_0 : i32, i32
  }
  func.func @transform_2(%arg0: i32) -> (i32, i32) {
    %c0_i32 = arith.constant 0 : i32
    %c0_i32_0 = arith.constant 0 : i32
    %c0_i32_1 = arith.constant 0 : i32
    return %c0_i32, %c0_i32_0 : i32, i32
  }
  func.func @transform_3(%arg0: i32) -> (i32, i32) {
    %c0_i32 = arith.constant 0 : i32
    %c0_i32_0 = arith.constant 0 : i32
    %c0_i32_1 = arith.constant 0 : i32
    return %c0_i32, %c0_i32_0 : i32, i32
  }
  func.func @transform_4(%arg0: i32) -> (i32, i32) {
    %c0_i32 = arith.constant 0 : i32
    %c0_i32_0 = arith.constant 0 : i32
    %c0_i32_1 = arith.constant 0 : i32
    return %c0_i32, %c0_i32_0 : i32, i32
  }
  func.func @transform_5(%arg0: i32) -> (i32, i32) {
    %c0_i32 = arith.constant 0 : i32
    %c0_i32_0 = arith.constant 0 : i32
    %c0_i32_1 = arith.constant 0 : i32
    return %c0_i32, %c0_i32_0 : i32, i32
  }
  func.func @transform_6(%arg0: i32) -> (i32, i32) {
    %c0_i32 = arith.constant 0 : i32
    %c0_i32_0 = arith.constant 0 : i32
    %c0_i32_1 = arith.constant 0 : i32
    return %c0_i32, %c0_i32_0 : i32, i32
  }
  func.func @transform_7(%arg0: i32) -> (i32, i32) {
    %c0_i32 = arith.constant 0 : i32
    %c0_i32_0 = arith.constant 0 : i32
    %c0_i32_1 = arith.constant 0 : i32
    return %c0_i32, %c0_i32_0 : i32, i32
  }
}

</mosaic_0001>

<llo_original>
// kernel: tpu_custom_call.1
$region0: #{tpu_custom_call.1}
  #allocation0 [shape = 'u32[]', space=smem, size = 0x4, offset = 0x4, fixed_abs, tag = 'smem constant byte address 0x4 - core index']
  #allocation1 [shape = 'u32[144,128]{1,0:T(1,128)}', space=vmem, size = 0x12000, scoped, tag = 'internal scratch']
  #allocation2 [shape = 'f32[2,128]{1,0:T(2,128)}', space=vmem, size = 0x400, scoped, tag = 'scratch operand']
  #allocation3 [shape = 'f32[2,128]{1,0:T(2,128)}', space=vmem, size = 0x400, scoped, tag = 'scratch operand']
  %s0 = inlined_call_operand.hbm [shape: f32[9,2,128], index: 0, kind: input, shape index: {}]
  %s1 = inlined_call_operand.hbm [shape: f32[128,128], index: 1, kind: input, shape index: {}]
  %s2 = inlined_call_operand.hbm [shape: f32[128,128], index: 2, kind: input, shape index: {}]
  %s3 = inlined_call_operand.hbm [shape: f32[128,128], index: 3, kind: input, shape index: {}]
  %s4 = inlined_call_operand.vmem [shape: f32[1,128], index: 4, kind: input, shape index: {}]
  %s5 = inlined_call_operand.hbm [shape: f32[128,128], index: 5, kind: input, shape index: {}]
  %s6 = inlined_call_operand.vmem [shape: f32[1,128], index: 6, kind: input, shape index: {}]
  %s7 = inlined_call_operand.hbm [shape: f32[2,128], index: 7, kind: output, shape index: {}]
  %s8 = sld [smem:[#allocation0]]
  $region89: #{tpu_custom_call.1} parent=0
    _
  %s10 = ssub.s32 1, %s8
  %s11 = scalar_select 0, %s10, %s8
  $region1: #{tpu_custom_call.1} parent=0
    #allocation4 [shape = 'u8[6144]{0}', space=vmem, size = 0x1800, scoped, tag = 'input window, operand 0']
    #allocation5 [shape = 's32[2]{0}', space=sflag, size = 0x8, scoped, tag = 'scoped memory for tpu_custom_call.1']
    #allocation6 [shape = 's32[2]{0}', space=sflag, size = 0x8, scoped, tag = 'scoped memory for tpu_custom_call.1']
    #allocation7 [shape = 'u8[65536]{0}', space=vmem, size = 0x10000, scoped, tag = 'input window, operand 1, single buffered']
    #allocation8 [shape = 's32[1]{0}', space=sflag, size = 0x4, scoped, tag = 'scoped memory for tpu_custom_call.1']
    #allocation9 [shape = 'u8[65536]{0}', space=vmem, size = 0x10000, scoped, tag = 'input window, operand 2, single buffered']
    #allocation10 [shape = 'u8[65536]{0}', space=vmem, size = 0x10000, scoped, tag = 'input window, operand 3, single buffered']
    #allocation11 [shape = 's32[1]{0}', space=sflag, size = 0x4, scoped, tag = 'scoped memory for tpu_custom_call.1']
    #allocation12 [shape = 'u8[65536]{0}', space=vmem, size = 0x10000, scoped, tag = 'input window, operand 5, single buffered']
    #allocation13 [shape = 'u8[1024]{0}', space=vmem, size = 0x400, scoped, tag = 'output window, operand 0, single buffered']
    %12 = vsyncpa [#allocation5], 0
    %s13 = scalar_lea.sflag [#allocation5], 1
    %14 = vsyncpa %s13, 0
    %15 = vsyncpa [#allocation8], 0
    %16 = vsyncpa [#allocation11], 0
    %17 = vsyncpa [#allocation6], 0
    loop: start=0, step=1, limit=5
    $region2: #{tpu_custom_call.1} parent=1 // loop_pre_header
      _
    $region3: #{tpu_custom_call.1} parent=1 // loop_header
      %s19 = sphi 0, %s23
      %p20 = scmp.ge.s32.totalorder %s19, 5
      %s29 = sphi 0, %s31
      %s32 = sphi 0, %s29
      %s33 = sphi 0, %s32
      %s49 = sphi 0, %s33
      %s53 = sphi 0, %s53
      %s55 = sphi 0, %s53
      %s56 = sphi 0, %s55
      %s70 = sphi 0, %s56
      %s74 = sphi 0, %s74
      %s76 = sphi 0, %s74
      %s77 = sphi 0, %s76
      %s91 = sphi 0, %s77
      %s95 = sphi 0, %s95
      %s97 = sphi 0, %s95
      %s98 = sphi 0, %s97
      %s112 = sphi 0, %s98
      %s116 = sphi 0, %s116
      %s118 = sphi 0, %s116
      %s119 = sphi 0, %s118
      %s133 = sphi 0, %s119
      %s137 = sphi 0, %s137
      %s139 = sphi 0, %s137
      %s140 = sphi 0, %s139
      %s154 = sphi 0, %s140
      %s158 = sphi 0, %s158
      %s160 = sphi 0, %s158
      %s161 = sphi 0, %s160
      %s175 = sphi 0, %s161
      %s179 = sphi 0, %s179
      %s181 = sphi 0, %s179
      %s182 = sphi 0, %s181
      %s196 = sphi 0, %s182
    $region4: #{tpu_custom_call.1} parent=1 // loop_header_branch
      %22 = sbr.rel (%p20) target = $region8
    $region5: #{tpu_custom_call.1} parent=1 // loop_body
      %s24 = ssub.s32 %s19, 1
      %s25 = ssub.s32 %s19, 2
      %s26 = sadd.s32 %s19, 1
      %s27 = ssub.s32 %s19, %s26
      %p28 = scmp.eq.s32.totalorder %s27, 0
      %s30 = sadd.s32 %s29, 1
      %s31 = scalar_select %p28, %s29, %s30
      %p34 = pneg %p28
      %p35 = scmp.eq.s32.totalorder %s19, 2
      %p36 = por %p34, %p35
      %p37 = scmp.ne.s32.totalorder %s29, %s32
      %p38 = scmp.eq.s32.totalorder %s19, 0
      %p39 = por %p37, %p38
      %p40 = scmp.ne.s32.totalorder %s29, %s32
      %p41 = scmp.eq.s32.totalorder %s24, 2
      %p42 = por %p40, %p41
      %p43 = scmp.ne.s32.totalorder %s32, %s33
      %p44 = scmp.eq.s32.totalorder %s24, 0
      %p45 = por %p43, %p44
      %p46 = scmp.ne.s32.totalorder %s32, %s33
      %p47 = scmp.eq.s32.totalorder %s25, 2
      %p48 = por %p46, %p47
      %p50 = scmp.ne.s32.totalorder %s33, %s49
      %p51 = scmp.eq.s32.totalorder %s25, 0
      %p52 = por %p50, %p51
      %s54 = sadd.s32 %s53, 1
      %p57 = scmp.eq.s32.totalorder %s19, 2
      %p58 = scmp.ne.s32.totalorder %s53, %s55
      %p59 = scmp.eq.s32.totalorder %s19, 0
      %p60 = por %p58, %p59
      %p61 = scmp.ne.s32.totalorder %s53, %s55
      %p62 = scmp.eq.s32.totalorder %s24, 2
      %p63 = por %p61, %p62
      %p64 = scmp.ne.s32.totalorder %s55, %s56
      %p65 = scmp.eq.s32.totalorder %s24, 0
      %p66 = por %p64, %p65
      %p67 = scmp.ne.s32.totalorder %s55, %s56
      %p68 = scmp.eq.s32.totalorder %s25, 2
      %p69 = por %p67, %p68
      %p71 = scmp.ne.s32.totalorder %s56, %s70
      %p72 = scmp.eq.s32.totalorder %s25, 0
      %p73 = por %p71, %p72
      %s75 = sadd.s32 %s74, 1
      %p78 = scmp.eq.s32.totalorder %s19, 2
      %p79 = scmp.ne.s32.totalorder %s74, %s76
      %p80 = scmp.eq.s32.totalorder %s19, 0
      %p81 = por %p79, %p80
      %p82 = scmp.ne.s32.totalorder %s74, %s76
      %p83 = scmp.eq.s32.totalorder %s24, 2
      %p84 = por %p82, %p83
      %p85 = scmp.ne.s32.totalorder %s76, %s77
      %p86 = scmp.eq.s32.totalorder %s24, 0
      %p87 = por %p85, %p86
      %p88 = scmp.ne.s32.totalorder %s76, %s77
      %p89 = scmp.eq.s32.totalorder %s25, 2
      %p90 = por %p88, %p89
      %p92 = scmp.ne.s32.totalorder %s77, %s91
      %p93 = scmp.eq.s32.totalorder %s25, 0
      %p94 = por %p92, %p93
      %s96 = sadd.s32 %s95, 1
      %p99 = scmp.eq.s32.totalorder %s19, 2
      %p100 = scmp.ne.s32.totalorder %s95, %s97
      %p101 = scmp.eq.s32.totalorder %s19, 0
      %p102 = por %p100, %p101
      %p103 = scmp.ne.s32.totalorder %s95, %s97
      %p104 = scmp.eq.s32.totalorder %s24, 2
      %p105 = por %p103, %p104
      %p106 = scmp.ne.s32.totalorder %s97, %s98
      %p107 = scmp.eq.s32.totalorder %s24, 0
      %p108 = por %p106, %p107
      %p109 = scmp.ne.s32.totalorder %s97, %s98
      %p110 = scmp.eq.s32.totalorder %s25, 2
      %p111 = por %p109, %p110
      %p113 = scmp.ne.s32.totalorder %s98, %s112
      %p114 = scmp.eq.s32.totalorder %s25, 0
      %p115 = por %p113, %p114
      %s117 = sadd.s32 %s116, 1
      %p120 = scmp.eq.s32.totalorder %s19, 2
      %p121 = scmp.ne.s32.totalorder %s116, %s118
      %p122 = scmp.eq.s32.totalorder %s19, 0
      %p123 = por %p121, %p122
      %p124 = scmp.ne.s32.totalorder %s116, %s118
      %p125 = scmp.eq.s32.totalorder %s24, 2
      %p126 = por %p124, %p125
      %p127 = scmp.ne.s32.totalorder %s118, %s119
      %p128 = scmp.eq.s32.totalorder %s24, 0
      %p129 = por %p127, %p128
      %p130 = scmp.ne.s32.totalorder %s118, %s119
      %p131 = scmp.eq.s32.totalorder %s25, 2
      %p132 = por %p130, %p131
      %p134 = scmp.ne.s32.totalorder %s119, %s133
      %p135 = scmp.eq.s32.totalorder %s25, 0
      %p136 = por %p134, %p135
      %s138 = sadd.s32 %s137, 1
      %p141 = scmp.eq.s32.totalorder %s19, 2
      %p142 = scmp.ne.s32.totalorder %s137, %s139
      %p143 = scmp.eq.s32.totalorder %s19, 0
      %p144 = por %p142, %p143
      %p145 = scmp.ne.s32.totalorder %s137, %s139
      %p146 = scmp.eq.s32.totalorder %s24, 2
      %p147 = por %p145, %p146
      %p148 = scmp.ne.s32.totalorder %s139, %s140
      %p149 = scmp.eq.s32.totalorder %s24, 0
      %p150 = por %p148, %p149
      %p151 = scmp.ne.s32.totalorder %s139, %s140
      %p152 = scmp.eq.s32.totalorder %s25, 2
      %p153 = por %p151, %p152
      %p155 = scmp.ne.s32.totalorder %s140, %s154
      %p156 = scmp.eq.s32.totalorder %s25, 0
      %p157 = por %p155, %p156
      %s159 = sadd.s32 %s158, 1
      %p162 = scmp.eq.s32.totalorder %s19, 2
      %p163 = scmp.ne.s32.totalorder %s158, %s160
      %p164 = scmp.eq.s32.totalorder %s19, 0
      %p165 = por %p163, %p164
      %p166 = scmp.ne.s32.totalorder %s158, %s160
      %p167 = scmp.eq.s32.totalorder %s24, 2
      %p168 = por %p166, %p167
      %p169 = scmp.ne.s32.totalorder %s160, %s161
      %p170 = scmp.eq.s32.totalorder %s24, 0
      %p171 = por %p169, %p170
      %p172 = scmp.ne.s32.totalorder %s160, %s161
      %p173 = scmp.eq.s32.totalorder %s25, 2
      %p174 = por %p172, %p173
      %p176 = scmp.ne.s32.totalorder %s161, %s175
      %p177 = scmp.eq.s32.totalorder %s25, 0
      %p178 = por %p176, %p177
      %s180 = sadd.s32 %s179, 1
      %p183 = scmp.eq.s32.totalorder %s19, 2
      %p184 = scmp.ne.s32.totalorder %s179, %s181
      %p185 = scmp.eq.s32.totalorder %s19, 0
      %p186 = por %p184, %p185
      %p187 = scmp.ne.s32.totalorder %s179, %s181
      %p188 = scmp.eq.s32.totalorder %s24, 2
      %p189 = por %p187, %p188
      %p190 = scmp.ne.s32.totalorder %s181, %s182
      %p191 = scmp.eq.s32.totalorder %s24, 0
      %p192 = por %p190, %p191
      %p193 = scmp.ne.s32.totalorder %s181, %s182
      %p194 = scmp.eq.s32.totalorder %s25, 2
      %p195 = por %p193, %p194
      %p197 = scmp.ne.s32.totalorder %s182, %s196
      %p198 = scmp.eq.s32.totalorder %s25, 0
      %p199 = por %p197, %p198
      %p200 = scmp.le.s32.totalorder 1, %s19
      %p201 = scmp.lt.s32.totalorder %s19, 4
      %p202 = pnand %p200, %p201
      %p203 = pneg %p202
      // Predicated region
      $region9: #{tpu_custom_call.1} parent=5 // pred_check
        _
      $region10: #{tpu_custom_call.1} parent=5 // pred_check_branch
        %205 = sbr.rel (%p202) target = $region12
      $region11: #{tpu_custom_call.1} parent=5 // pred_region
        %s206 = ssub.s32 %s19, 1
        // Predicated region
        $region13: #{tpu_custom_call.1} parent=11 // pred_check
          %p207 = pneg %p66
        $region14: #{tpu_custom_call.1} parent=11 // pred_check_branch
          %209 = sbr.rel (%p207) target = $region16
        $region15: #{tpu_custom_call.1} parent=11 // pred_region
          %s211 = ssub.s32 2048, 2048
          %212 = vsyncadd [#allocation8], %s211
          %s213 = sshll.u32 [#allocation7], 4
          %s214 = int_to_ptr.vmem [resolvable:$true] %s213
          %219 = dma.hbm_to_vmem [thread:$0]  %s1, 2048, %s214, [#allocation8], 128, 128, 8
        $region16: #{tpu_custom_call.1} parent=11 // pred_fallthru
          _
        // Predicated region
        $region17: #{tpu_custom_call.1} parent=11 // pred_check
          %p220 = pneg %p87
        $region18: #{tpu_custom_call.1} parent=11 // pred_check_branch
          %222 = sbr.rel (%p220) target = $region20
        $region19: #{tpu_custom_call.1} parent=11 // pred_region
          %s224 = ssub.s32 2048, 2048
          %225 = vsyncadd [#allocation8], %s224
          %s226 = sshll.u32 [#allocation9], 4
          %s227 = int_to_ptr.vmem [resolvable:$true] %s226
          %232 = dma.hbm_to_vmem [thread:$0]  %s2, 2048, %s227, [#allocation8], 128, 128, 8
        $region20: #{tpu_custom_call.1} parent=11 // pred_fallthru
          _
        // Predicated region
        $region21: #{tpu_custom_call.1} parent=11 // pred_check
          %p233 = pneg %p108
        $region22: #{tpu_custom_call.1} parent=11 // pred_check_branch
          %235 = sbr.rel (%p233) target = $region24
        $region23: #{tpu_custom_call.1} parent=11 // pred_region
          %s237 = ssub.s32 2048, 2048
          %238 = vsyncadd [#allocation11], %s237
          %s239 = sshll.u32 [#allocation10], 4
          %s240 = int_to_ptr.vmem [resolvable:$true] %s239
          %245 = dma.hbm_to_vmem [thread:$0]  %s3, 2048, %s240, [#allocation11], 128, 128, 8
        $region24: #{tpu_custom_call.1} parent=11 // pred_fallthru
          _
        // Predicated region
        $region25: #{tpu_custom_call.1} parent=11 // pred_check
          %p246 = pneg %p129
        $region26: #{tpu_custom_call.1} parent=11 // pred_check_branch
          %248 = sbr.rel (%p246) target = $region28
        $region27: #{tpu_custom_call.1} parent=11 // pred_region
          _
        $region28: #{tpu_custom_call.1} parent=11 // pred_fallthru
          _
        // Predicated region
        $region29: #{tpu_custom_call.1} parent=11 // pred_check
          %p249 = pneg %p150
        $region30: #{tpu_custom_call.1} parent=11 // pred_check_branch
          %251 = sbr.rel (%p249) target = $region32
        $region31: #{tpu_custom_call.1} parent=11 // pred_region
          %s253 = ssub.s32 2048, 2048
          %254 = vsyncadd [#allocation11], %s253
          %s255 = sshll.u32 [#allocation12], 4
          %s256 = int_to_ptr.vmem [resolvable:$true] %s255
          %261 = dma.hbm_to_vmem [thread:$0]  %s5, 2048, %s256, [#allocation11], 128, 128, 8
        $region32: #{tpu_custom_call.1} parent=11 // pred_fallthru
          _
        // Predicated region
        $region33: #{tpu_custom_call.1} parent=11 // pred_check
          %p262 = pneg %p171
        $region34: #{tpu_custom_call.1} parent=11 // pred_check_branch
          %264 = sbr.rel (%p262) target = $region36
        $region35: #{tpu_custom_call.1} parent=11 // pred_region
          _
        $region36: #{tpu_custom_call.1} parent=11 // pred_fallthru
          _
      $region12: #{tpu_custom_call.1} parent=5 // pred_fallthru
        _
      %p265 = scmp.lt.s32.totalorder %s19, 3
      // Predicated region
      $region37: #{tpu_custom_call.1} parent=5 // pred_check
        %p266 = pneg %p265
      $region38: #{tpu_custom_call.1} parent=5 // pred_check_branch
        %268 = sbr.rel (%p266) target = $region40
      $region39: #{tpu_custom_call.1} parent=5 // pred_region
        // Predicated region
        $region41: #{tpu_custom_call.1} parent=39 // pred_check
          %p269 = pneg %p39
        $region42: #{tpu_custom_call.1} parent=39 // pred_check_branch
          %271 = sbr.rel (%p269) target = $region44
        $region43: #{tpu_custom_call.1} parent=39 // pred_region
          %s272 = sand.u32 %s29, 1
          %s273 = scalar_lea.sflag [#allocation5], %s272
          %s274 = sand.u32 %s29, 1
          %s275 = smul.addr %s274, 6
          %s276 = scalar_lea.vmem [#allocation4], %s275
          %s277 = smul.u32 3, %s19
          %s279 = ssub.s32 96, 96
          %280 = vsyncadd %s273, %s279
          %s281 = smul.addr %s277, 32
          %s282 = scalar_lea.hbm %s0, %s281
          %s283 = sshll.u32 %s276, 4
          %s284 = int_to_ptr.vmem [resolvable:$true] %s283
          %289 = dma.hbm_to_vmem [thread:$0]  %s282, 96, %s284, %s273, 32, 32, 2
        $region44: #{tpu_custom_call.1} parent=39 // pred_fallthru
          _
      $region40: #{tpu_custom_call.1} parent=5 // pred_fallthru
        _
      %p290 = scmp.le.s32.totalorder 1, %s19
      %p291 = scmp.lt.s32.totalorder %s19, 4
      %p292 = pnand %p290, %p291
      %p293 = pneg %p292
      // Predicated region
      $region45: #{tpu_custom_call.1} parent=5 // pred_check
        _
      $region46: #{tpu_custom_call.1} parent=5 // pred_check_branch
        %295 = sbr.rel (%p292) target = $region48
      $region47: #{tpu_custom_call.1} parent=5 // pred_region
        %s296 = ssub.s32 %s19, 1
        %s297 = sand.u32 %s32, 1
        %s298 = scalar_lea.sflag [#allocation5], %s297
        %s299 = sand.u32 %s32, 1
        %s300 = smul.addr %s299, 6
        %s301 = scalar_lea.vmem [#allocation4], %s300
        // Predicated region
        $region49: #{tpu_custom_call.1} parent=47 // pred_check
          %p302 = pneg %p45
        $region50: #{tpu_custom_call.1} parent=47 // pred_check_branch
          %304 = sbr.rel (%p302) target = $region52
        $region51: #{tpu_custom_call.1} parent=47 // pred_region
          %305 = dma.done %s298, 96
        $region52: #{tpu_custom_call.1} parent=47 // pred_fallthru
          _
        // Predicated region
        $region53: #{tpu_custom_call.1} parent=47 // pred_check
          %p306 = pneg %p66
        $region54: #{tpu_custom_call.1} parent=47 // pred_check_branch
          %308 = sbr.rel (%p306) target = $region56
        $region55: #{tpu_custom_call.1} parent=47 // pred_region
          %309 = dma.done [#allocation8], 2048
        $region56: #{tpu_custom_call.1} parent=47 // pred_fallthru
          _
        // Predicated region
        $region57: #{tpu_custom_call.1} parent=47 // pred_check
          %p310 = pneg %p87
        $region58: #{tpu_custom_call.1} parent=47 // pred_check_branch
          %312 = sbr.rel (%p310) target = $region60
        $region59: #{tpu_custom_call.1} parent=47 // pred_region
          %313 = dma.done [#allocation8], 2048
        $region60: #{tpu_custom_call.1} parent=47 // pred_fallthru
          _
        // Predicated region
        $region61: #{tpu_custom_call.1} parent=47 // pred_check
          %p314 = pneg %p108
        $region62: #{tpu_custom_call.1} parent=47 // pred_check_branch
          %316 = sbr.rel (%p314) target = $region64
        $region63: #{tpu_custom_call.1} parent=47 // pred_region
          %317 = dma.done [#allocation11], 2048
        $region64: #{tpu_custom_call.1} parent=47 // pred_fallthru
          _
        // Predicated region
        $region65: #{tpu_custom_call.1} parent=47 // pred_check
          %p318 = pneg %p150
        $region66: #{tpu_custom_call.1} parent=47 // pred_check_branch
          %320 = sbr.rel (%p318) target = $region68
        $region67: #{tpu_custom_call.1} parent=47 // pred_region
          %321 = dma.done [#allocation11], 2048
        $region68: #{tpu_custom_call.1} parent=47 // pred_fallthru
          _
        %s322 = sand.u32 %s32, 1
        %s323 = scalar_lea.sflag [#allocation5], %s322
        %s324 = sand.u32 %s32, 1
        %s325 = smul.addr %s324, 6
        %s326 = scalar_lea.vmem [#allocation4], %s325
        %p327 = pneg %p45
        %p328 = pneg %p42
        %p329 = pneg %p66
        %p330 = pneg %p63
        %p331 = pneg %p87
        %p332 = pneg %p84
        %p333 = pneg %p108
        %p334 = pneg %p105
        %p335 = pneg %p129
        %p336 = pneg %p126
        %p337 = pneg %p150
        %p338 = pneg %p147
        %p339 = pneg %p171
        %p340 = pneg %p168
        %p341 = pneg %p192
        %p342 = pneg %p189
        %s343 = smul.u32 3, %s24
        %p344 = scmp.eq.s32.totalorder %s24, 0
        // Predicated region
        $region69: #{tpu_custom_call.1} parent=47 // pred_check
          %p345 = pneg %p344
        $region70: #{tpu_custom_call.1} parent=47 // pred_check_branch
          %347 = sbr.rel (%p345) target = $region72
        $region71: #{tpu_custom_call.1} parent=47 // pred_region
          %348 = vst [vmem:[#allocation2] sm:$0x3] 0.0
          %349 = vst [vmem:[#allocation3] sm:$0x3] 0.0
        $region72: #{tpu_custom_call.1} parent=47 // pred_fallthru
          _
        %v350 = vld [vmem:[%s4] sm:$0x1]
        %v352 = vlaneseq
        %v353 = vshrl.u32 %v352, 7
        %v354 = vsub.s32 0, %v353
        %v355 = vrot.slane %v350, %v354
        %s357 = smul.u32 %s24, 3
        %v358 = vld [vmem:[#allocation2] sm:$0x3]
        %v359 = vld [vmem:[#allocation3] sm:$0x3]
        %v360 = vld [vmem:[%s301] sm:$0x3]
        %v361 = vld [vmem:[#allocation7] sm:$0xff]
        %v362 = vld [vmem:[#allocation7 + $0x8] sm:$0xff]
        %v363 = vld [vmem:[#allocation7 + $0x10] sm:$0xff]
        %v364 = vld [vmem:[#allocation7 + $0x18] sm:$0xff]
        %v365 = vld [vmem:[#allocation7 + $0x20] sm:$0xff]
        %v366 = vld [vmem:[#allocation7 + $0x28] sm:$0xff]
        %v367 = vld [vmem:[#allocation7 + $0x30] sm:$0xff]
        %v368 = vld [vmem:[#allocation7 + $0x38] sm:$0xff]
        %v369 = vld [vmem:[#allocation7 + $0x40] sm:$0xff]
        %v370 = vld [vmem:[#allocation7 + $0x48] sm:$0xff]
        %v371 = vld [vmem:[#allocation7 + $0x50] sm:$0xff]
        %v372 = vld [vmem:[#allocation7 + $0x58] sm:$0xff]
        %v373 = vld [vmem:[#allocation7 + $0x60] sm:$0xff]
        %v374 = vld [vmem:[#allocation7 + $0x68] sm:$0xff]
        %v375 = vld [vmem:[#allocation7 + $0x70] sm:$0xff]
        %v376 = vld [vmem:[#allocation7 + $0x78] sm:$0xff]
        %377 = vmatprep.subr.mxu0 0.0
        %378 = vmatpush1.msra.mxu0 %v376
        %379 = vmatprep.subr.mxu0 0.0
        %380 = vmatpush1.msra.mxu0 %v375
        %381 = vmatprep.subr.mxu0 0.0
        %382 = vmatpush1.msra.mxu0 %v374
        %383 = vmatprep.subr.mxu0 0.0
        %384 = vmatpush1.msra.mxu0 %v373
        %385 = vmatprep.subr.mxu0 0.0
        %386 = vmatpush1.msra.mxu0 %v372
        %387 = vmatprep.subr.mxu0 0.0
        %388 = vmatpush1.msra.mxu0 %v371
        %389 = vmatprep.subr.mxu0 0.0
        %390 = vmatpush1.msra.mxu0 %v370
        %391 = vmatprep.subr.mxu0 0.0
        %392 = vmatpush1.msra.mxu0 %v369
        %393 = vmatprep.subr.mxu0 0.0
        %394 = vmatpush1.msra.mxu0 %v368
        %395 = vmatprep.subr.mxu0 0.0
        %396 = vmatpush1.msra.mxu0 %v367
        %397 = vmatprep.subr.mxu0 0.0
        %398 = vmatpush1.msra.mxu0 %v366
        %399 = vmatprep.subr.mxu0 0.0
        %400 = vmatpush1.msra.mxu0 %v365
        %401 = vmatprep.subr.mxu0 0.0
        %402 = vmatpush1.msra.mxu0 %v364
        %403 = vmatprep.subr.mxu0 0.0
        %404 = vmatpush1.msra.mxu0 %v363
        %405 = vmatprep.subr.mxu0 0.0
        %406 = vmatpush1.msra.mxu0 %v362
        %407 = vmatprep.subr.mxu0 0.0
        %408 = vmatpush1.msra.mxu0 %v361
        %409 = vmatprep.subr.mxu0 0.0
        %410 = vmatpush2.msra.mxu0 0.0
        %411 = vmatprep.subr.mxu0 0.0
        %412 = vmatpush2.msra.mxu0 0.0
        %413 = vmatprep.subr.mxu0 0.0
        %414 = vmatpush2.msra.mxu0 0.0
        %415 = vmatprep.subr.mxu0 0.0
        %416 = vmatpush2.msra.mxu0 0.0
        %417 = vmatprep.subr.mxu0 0.0
        %418 = vmatpush2.msra.mxu0 0.0
        %419 = vmatprep.subr.mxu0 0.0
        %420 = vmatpush2.msra.mxu0 0.0
        %421 = vmatprep.subr.mxu0 0.0
        %422 = vmatpush2.msra.mxu0 0.0
        %423 = vmatprep.subr.mxu0 0.0
        %424 = vmatpush2.msra.mxu0 0.0
        %425 = vmatprep.subr.mxu0 0.0
        %426 = vmatpush2.msra.mxu0 0.0
        %427 = vmatprep.subr.mxu0 0.0
        %428 = vmatpush2.msra.mxu0 0.0
        %429 = vmatprep.subr.mxu0 0.0
        %430 = vmatpush2.msra.mxu0 0.0
        %431 = vmatprep.subr.mxu0 0.0
        %432 = vmatpush2.msra.mxu0 0.0
        %433 = vmatprep.subr.mxu0 0.0
        %434 = vmatpush2.msra.mxu0 0.0
        %435 = vmatprep.subr.mxu0 0.0
        %436 = vmatpush2.msra.mxu0 0.0
        %437 = vmatprep.subr.mxu0 0.0
        %438 = vmatpush2.msra.mxu0 0.0
        %439 = vmatprep.subr.mxu0 0.0
        %440 = vmatpush2.msra.mxu0 0.0
        %441 = vmatprep.mubr.f32.mxu0 0.0
        %442 = vmatmul.mubr.f32.gmra.mxu0 %v358
        %v443 = vpop.f32.mrf.mxu0
        %v444 = vadd.f32 0.0, %v443
        %v445 = vpop.f32.mrf.mxu0
        %446 = vdwg.mxu0
        %v447 = vadd.f32 %v360, %v444
        %v448 = vmax.f32 %v447, 0.0
        %v449 = vld [vmem:[#allocation9] sm:$0xff]
        %v450 = vld [vmem:[#allocation9 + $0x8] sm:$0xff]
        %v451 = vld [vmem:[#allocation9 + $0x10] sm:$0xff]
        %v452 = vld [vmem:[#allocation9 + $0x18] sm:$0xff]
        %v453 = vld [vmem:[#allocation9 + $0x20] sm:$0xff]
        %v454 = vld [vmem:[#allocation9 + $0x28] sm:$0xff]
        %v455 = vld [vmem:[#allocation9 + $0x30] sm:$0xff]
        %v456 = vld [vmem:[#allocation9 + $0x38] sm:$0xff]
        %v457 = vld [vmem:[#allocation9 + $0x40] sm:$0xff]
        %v458 = vld [vmem:[#allocation9 + $0x48] sm:$0xff]
        %v459 = vld [vmem:[#allocation9 + $0x50] sm:$0xff]
        %v460 = vld [vmem:[#allocation9 + $0x58] sm:$0xff]
        %v461 = vld [vmem:[#allocation9 + $0x60] sm:$0xff]
        %v462 = vld [vmem:[#allocation9 + $0x68] sm:$0xff]
        %v463 = vld [vmem:[#allocation9 + $0x70] sm:$0xff]
        %v464 = vld [vmem:[#allocation9 + $0x78] sm:$0xff]
        %v465 = vld [vmem:[#allocation10] sm:$0xff]
        %v466 = vld [vmem:[#allocation10 + $0x8] sm:$0xff]
        %v467 = vld [vmem:[#allocation10 + $0x10] sm:$0xff]
        %v468 = vld [vmem:[#allocation10 + $0x18] sm:$0xff]
        %v469 = vld [vmem:[#allocation10 + $0x20] sm:$0xff]
        %v470 = vld [vmem:[#allocation10 + $0x28] sm:$0xff]
        %v471 = vld [vmem:[#allocation10 + $0x30] sm:$0xff]
        %v472 = vld [vmem:[#allocation10 + $0x38] sm:$0xff]
        %v473 = vld [vmem:[#allocation10 + $0x40] sm:$0xff]
        %v474 = vld [vmem:[#allocation10 + $0x48] sm:$0xff]
        %v475 = vld [vmem:[#allocation10 + $0x50] sm:$0xff]
        %v476 = vld [vmem:[#allocation10 + $0x58] sm:$0xff]
        %v477 = vld [vmem:[#allocation10 + $0x60] sm:$0xff]
        %v478 = vld [vmem:[#allocation10 + $0x68] sm:$0xff]
        %v479 = vld [vmem:[#allocation10 + $0x70] sm:$0xff]
        %v480 = vld [vmem:[#allocation10 + $0x78] sm:$0xff]
        %481 = vmatprep.subr.mxu0 0.0
        %482 = vmatpush1.msra.mxu0 %v480
        %483 = vmatprep.subr.mxu0 0.0
        %484 = vmatpush1.msra.mxu0 %v479
        %485 = vmatprep.subr.mxu0 0.0
        %486 = vmatpush1.msra.mxu0 %v478
        %487 = vmatprep.subr.mxu0 0.0
        %488 = vmatpush1.msra.mxu0 %v477
        %489 = vmatprep.subr.mxu0 0.0
        %490 = vmatpush1.msra.mxu0 %v476
        %491 = vmatprep.subr.mxu0 0.0
        %492 = vmatpush1.msra.mxu0 %v475
        %493 = vmatprep.subr.mxu0 0.0
        %494 = vmatpush1.msra.mxu0 %v474
        %495 = vmatprep.subr.mxu0 0.0
        %496 = vmatpush1.msra.mxu0 %v473
        %497 = vmatprep.subr.mxu0 0.0
        %498 = vmatpush1.msra.mxu0 %v472
        %499 = vmatprep.subr.mxu0 0.0
        %500 = vmatpush1.msra.mxu0 %v471
        %501 = vmatprep.subr.mxu0 0.0
        %502 = vmatpush1.msra.mxu0 %v470
        %503 = vmatprep.subr.mxu0 0.0
        %504 = vmatpush1.msra.mxu0 %v469
        %505 = vmatprep.subr.mxu0 0.0
        %506 = vmatpush1.msra.mxu0 %v468
        %507 = vmatprep.subr.mxu0 0.0
        %508 = vmatpush1.msra.mxu0 %v467
        %509 = vmatprep.subr.mxu0 0.0
        %510 = vmatpush1.msra.mxu0 %v466
        %511 = vmatprep.subr.mxu0 0.0
        %512 = vmatpush1.msra.mxu0 %v465
        %513 = vmatprep.subr.mxu0 0.0
        %514 = vmatpush2.msra.mxu0 0.0
        %515 = vmatprep.subr.mxu0 0.0
        %516 = vmatpush2.msra.mxu0 0.0
        %517 = vmatprep.subr.mxu0 0.0
        %518 = vmatpush2.msra.mxu0 0.0
        %519 = vmatprep.subr.mxu0 0.0
        %520 = vmatpush2.msra.mxu0 0.0
        %521 = vmatprep.subr.mxu0 0.0
        %522 = vmatpush2.msra.mxu0 0.0
        %523 = vmatprep.subr.mxu0 0.0
        %524 = vmatpush2.msra.mxu0 0.0
        %525 = vmatprep.subr.mxu0 0.0
        %526 = vmatpush2.msra.mxu0 0.0
        %527 = vmatprep.subr.mxu0 0.0
        %528 = vmatpush2.msra.mxu0 0.0
        %529 = vmatprep.subr.mxu0 0.0
        %530 = vmatpush2.msra.mxu0 0.0
        %531 = vmatprep.subr.mxu0 0.0
        %532 = vmatpush2.msra.mxu0 0.0
        %533 = vmatprep.subr.mxu0 0.0
        %534 = vmatpush2.msra.mxu0 0.0
        %535 = vmatprep.subr.mxu0 0.0
        %536 = vmatpush2.msra.mxu0 0.0
        %537 = vmatprep.subr.mxu0 0.0
        %538 = vmatpush2.msra.mxu0 0.0
        %539 = vmatprep.subr.mxu0 0.0
        %540 = vmatpush2.msra.mxu0 0.0
        %541 = vmatprep.subr.mxu0 0.0
        %542 = vmatpush2.msra.mxu0 0.0
        %543 = vmatprep.subr.mxu0 0.0
        %544 = vmatpush2.msra.mxu0 0.0
        %545 = vmatprep.mubr.f32.mxu0 0.0
        %546 = vmatmul.mubr.f32.gmra.mxu0 %v359
        %v547 = vpop.f32.mrf.mxu0
        %v548 = vadd.f32 0.0, %v547
        %v549 = vpop.f32.mrf.mxu0
        %550 = vdwg.mxu0
        %551 = vmatprep.subr.mxu0 0.0
        %552 = vmatpush1.msra.mxu0 %v464
        %553 = vmatprep.subr.mxu0 0.0
        %554 = vmatpush1.msra.mxu0 %v463
        %555 = vmatprep.subr.mxu0 0.0
        %556 = vmatpush1.msra.mxu0 %v462
        %557 = vmatprep.subr.mxu0 0.0
        %558 = vmatpush1.msra.mxu0 %v461
        %559 = vmatprep.subr.mxu0 0.0
        %560 = vmatpush1.msra.mxu0 %v460
        %561 = vmatprep.subr.mxu0 0.0
        %562 = vmatpush1.msra.mxu0 %v459
        %563 = vmatprep.subr.mxu0 0.0
        %564 = vmatpush1.msra.mxu0 %v458
        %565 = vmatprep.subr.mxu0 0.0
        %566 = vmatpush1.msra.mxu0 %v457
        %567 = vmatprep.subr.mxu0 0.0
        %568 = vmatpush1.msra.mxu0 %v456
        %569 = vmatprep.subr.mxu0 0.0
        %570 = vmatpush1.msra.mxu0 %v455
        %571 = vmatprep.subr.mxu0 0.0
        %572 = vmatpush1.msra.mxu0 %v454
        %573 = vmatprep.subr.mxu0 0.0
        %574 = vmatpush1.msra.mxu0 %v453
        %575 = vmatprep.subr.mxu0 0.0
        %576 = vmatpush1.msra.mxu0 %v452
        %577 = vmatprep.subr.mxu0 0.0
        %578 = vmatpush1.msra.mxu0 %v451
        %579 = vmatprep.subr.mxu0 0.0
        %580 = vmatpush1.msra.mxu0 %v450
        %581 = vmatprep.subr.mxu0 0.0
        %582 = vmatpush1.msra.mxu0 %v449
        %583 = vmatprep.subr.mxu0 0.0
        %584 = vmatpush2.msra.mxu0 0.0
        %585 = vmatprep.subr.mxu0 0.0
        %586 = vmatpush2.msra.mxu0 0.0
        %587 = vmatprep.subr.mxu0 0.0
        %588 = vmatpush2.msra.mxu0 0.0
        %589 = vmatprep.subr.mxu0 0.0
        %590 = vmatpush2.msra.mxu0 0.0
        %591 = vmatprep.subr.mxu0 0.0
        %592 = vmatpush2.msra.mxu0 0.0
        %593 = vmatprep.subr.mxu0 0.0
        %594 = vmatpush2.msra.mxu0 0.0
        %595 = vmatprep.subr.mxu0 0.0
        %596 = vmatpush2.msra.mxu0 0.0
        %597 = vmatprep.subr.mxu0 0.0
        %598 = vmatpush2.msra.mxu0 0.0
        %599 = vmatprep.subr.mxu0 0.0
        %600 = vmatpush2.msra.mxu0 0.0
        %601 = vmatprep.subr.mxu0 0.0
        %602 = vmatpush2.msra.mxu0 0.0
        %603 = vmatprep.subr.mxu0 0.0
        %604 = vmatpush2.msra.mxu0 0.0
        %605 = vmatprep.subr.mxu0 0.0
        %606 = vmatpush2.msra.mxu0 0.0
        %607 = vmatprep.subr.mxu0 0.0
        %608 = vmatpush2.msra.mxu0 0.0
        %609 = vmatprep.subr.mxu0 0.0
        %610 = vmatpush2.msra.mxu0 0.0
        %611 = vmatprep.subr.mxu0 0.0
        %612 = vmatpush2.msra.mxu0 0.0
        %613 = vmatprep.subr.mxu0 0.0
        %614 = vmatpush2.msra.mxu0 0.0
        %615 = vmatprep.mubr.f32.mxu0 0.0
        %616 = vmatmul.mubr.f32.gmra.mxu0 %v448
        %v617 = vpop.f32.mrf.mxu0
        %v618 = vadd.f32 %v548, %v617
        %v619 = vpop.f32.mrf.mxu0
        %620 = vdwg.mxu0
        %v621 = vadd.f32 %v618, %v355
        %v622 = vmax.f32 %v621, 0.0
        %p623 = scmp.lt.s32.totalorder %s357, 8
        %s624 = scalar_select %p623, 1, 0
        %v625 = vstv %s624
        %vm626 = vcmp.eq.s32.totalorder %v625, 1
        %v627 = vsel %vm626, %v448, %v358
        %v628 = vsel %vm626, %v622, %v359
        %s629 = scalar_lea.vmem %s301, 2 [#allocation4]
        %v630 = vld [vmem:[%s629] sm:$0x3]
        %631 = vmatprep.subr.mxu0 0.0
        %632 = vmatpush1.msra.mxu0 %v376
        %633 = vmatprep.subr.mxu0 0.0
        %634 = vmatpush1.msra.mxu0 %v375
        %635 = vmatprep.subr.mxu0 0.0
        %636 = vmatpush1.msra.mxu0 %v374
        %637 = vmatprep.subr.mxu0 0.0
        %638 = vmatpush1.msra.mxu0 %v373
        %639 = vmatprep.subr.mxu0 0.0
        %640 = vmatpush1.msra.mxu0 %v372
        %641 = vmatprep.subr.mxu0 0.0
        %642 = vmatpush1.msra.mxu0 %v371
        %643 = vmatprep.subr.mxu0 0.0
        %644 = vmatpush1.msra.mxu0 %v370
        %645 = vmatprep.subr.mxu0 0.0
        %646 = vmatpush1.msra.mxu0 %v369
        %647 = vmatprep.subr.mxu0 0.0
        %648 = vmatpush1.msra.mxu0 %v368
        %649 = vmatprep.subr.mxu0 0.0
        %650 = vmatpush1.msra.mxu0 %v367
        %651 = vmatprep.subr.mxu0 0.0
        %652 = vmatpush1.msra.mxu0 %v366
        %653 = vmatprep.subr.mxu0 0.0
        %654 = vmatpush1.msra.mxu0 %v365
        %655 = vmatprep.subr.mxu0 0.0
        %656 = vmatpush1.msra.mxu0 %v364
        %657 = vmatprep.subr.mxu0 0.0
        %658 = vmatpush1.msra.mxu0 %v363
        %659 = vmatprep.subr.mxu0 0.0
        %660 = vmatpush1.msra.mxu0 %v362
        %661 = vmatprep.subr.mxu0 0.0
        %662 = vmatpush1.msra.mxu0 %v361
        %663 = vmatprep.subr.mxu0 0.0
        %664 = vmatpush2.msra.mxu0 0.0
        %665 = vmatprep.subr.mxu0 0.0
        %666 = vmatpush2.msra.mxu0 0.0
        %667 = vmatprep.subr.mxu0 0.0
        %668 = vmatpush2.msra.mxu0 0.0
        %669 = vmatprep.subr.mxu0 0.0
        %670 = vmatpush2.msra.mxu0 0.0
        %671 = vmatprep.subr.mxu0 0.0
        %672 = vmatpush2.msra.mxu0 0.0
        %673 = vmatprep.subr.mxu0 0.0
        %674 = vmatpush2.msra.mxu0 0.0
        %675 = vmatprep.subr.mxu0 0.0
        %676 = vmatpush2.msra.mxu0 0.0
        %677 = vmatprep.subr.mxu0 0.0
        %678 = vmatpush2.msra.mxu0 0.0
        %679 = vmatprep.subr.mxu0 0.0
        %680 = vmatpush2.msra.mxu0 0.0
        %681 = vmatprep.subr.mxu0 0.0
        %682 = vmatpush2.msra.mxu0 0.0
        %683 = vmatprep.subr.mxu0 0.0
        %684 = vmatpush2.msra.mxu0 0.0
        %685 = vmatprep.subr.mxu0 0.0
        %686 = vmatpush2.msra.mxu0 0.0
        %687 = vmatprep.subr.mxu0 0.0
        %688 = vmatpush2.msra.mxu0 0.0
        %689 = vmatprep.subr.mxu0 0.0
        %690 = vmatpush2.msra.mxu0 0.0
        %691 = vmatprep.subr.mxu0 0.0
        %692 = vmatpush2.msra.mxu0 0.0
        %693 = vmatprep.subr.mxu0 0.0
        %694 = vmatpush2.msra.mxu0 0.0
        %695 = vmatprep.mubr.f32.mxu0 0.0
        %696 = vmatmul.mubr.f32.gmra.mxu0 %v627
        %v697 = vpop.f32.mrf.mxu0
        %v698 = vadd.f32 0.0, %v697
        %v699 = vpop.f32.mrf.mxu0
        %700 = vdwg.mxu0
        %v701 = vadd.f32 %v630, %v698
        %v702 = vmax.f32 %v701, 0.0
        %703 = vmatprep.subr.mxu0 0.0
        %704 = vmatpush1.msra.mxu0 %v480
        %705 = vmatprep.subr.mxu0 0.0
        %706 = vmatpush1.msra.mxu0 %v479
        %707 = vmatprep.subr.mxu0 0.0
        %708 = vmatpush1.msra.mxu0 %v478
        %709 = vmatprep.subr.mxu0 0.0
        %710 = vmatpush1.msra.mxu0 %v477
        %711 = vmatprep.subr.mxu0 0.0
        %712 = vmatpush1.msra.mxu0 %v476
        %713 = vmatprep.subr.mxu0 0.0
        %714 = vmatpush1.msra.mxu0 %v475
        %715 = vmatprep.subr.mxu0 0.0
        %716 = vmatpush1.msra.mxu0 %v474
        %717 = vmatprep.subr.mxu0 0.0
        %718 = vmatpush1.msra.mxu0 %v473
        %719 = vmatprep.subr.mxu0 0.0
        %720 = vmatpush1.msra.mxu0 %v472
        %721 = vmatprep.subr.mxu0 0.0
        %722 = vmatpush1.msra.mxu0 %v471
        %723 = vmatprep.subr.mxu0 0.0
        %724 = vmatpush1.msra.mxu0 %v470
        %725 = vmatprep.subr.mxu0 0.0
        %726 = vmatpush1.msra.mxu0 %v469
        %727 = vmatprep.subr.mxu0 0.0
        %728 = vmatpush1.msra.mxu0 %v468
        %729 = vmatprep.subr.mxu0 0.0
        %730 = vmatpush1.msra.mxu0 %v467
        %731 = vmatprep.subr.mxu0 0.0
        %732 = vmatpush1.msra.mxu0 %v466
        %733 = vmatprep.subr.mxu0 0.0
        %734 = vmatpush1.msra.mxu0 %v465
        %735 = vmatprep.subr.mxu0 0.0
        %736 = vmatpush2.msra.mxu0 0.0
        %737 = vmatprep.subr.mxu0 0.0
        %738 = vmatpush2.msra.mxu0 0.0
        %739 = vmatprep.subr.mxu0 0.0
        %740 = vmatpush2.msra.mxu0 0.0
        %741 = vmatprep.subr.mxu0 0.0
        %742 = vmatpush2.msra.mxu0 0.0
        %743 = vmatprep.subr.mxu0 0.0
        %744 = vmatpush2.msra.mxu0 0.0
        %745 = vmatprep.subr.mxu0 0.0
        %746 = vmatpush2.msra.mxu0 0.0
        %747 = vmatprep.subr.mxu0 0.0
        %748 = vmatpush2.msra.mxu0 0.0
        %749 = vmatprep.subr.mxu0 0.0
        %750 = vmatpush2.msra.mxu0 0.0
        %751 = vmatprep.subr.mxu0 0.0
        %752 = vmatpush2.msra.mxu0 0.0
        %753 = vmatprep.subr.mxu0 0.0
        %754 = vmatpush2.msra.mxu0 0.0
        %755 = vmatprep.subr.mxu0 0.0
        %756 = vmatpush2.msra.mxu0 0.0
        %757 = vmatprep.subr.mxu0 0.0
        %758 = vmatpush2.msra.mxu0 0.0
        %759 = vmatprep.subr.mxu0 0.0
        %760 = vmatpush2.msra.mxu0 0.0
        %761 = vmatprep.subr.mxu0 0.0
        %762 = vmatpush2.msra.mxu0 0.0
        %763 = vmatprep.subr.mxu0 0.0
        %764 = vmatpush2.msra.mxu0 0.0
        %765 = vmatprep.subr.mxu0 0.0
        %766 = vmatpush2.msra.mxu0 0.0
        %767 = vmatprep.mubr.f32.mxu0 0.0
        %768 = vmatmul.mubr.f32.gmra.mxu0 %v628
        %v769 = vpop.f32.mrf.mxu0
        %v770 = vadd.f32 0.0, %v769
        %v771 = vpop.f32.mrf.mxu0
        %772 = vdwg.mxu0
        %773 = vmatprep.subr.mxu0 0.0
        %774 = vmatpush1.msra.mxu0 %v464
        %775 = vmatprep.subr.mxu0 0.0
        %776 = vmatpush1.msra.mxu0 %v463
        %777 = vmatprep.subr.mxu0 0.0
        %778 = vmatpush1.msra.mxu0 %v462
        %779 = vmatprep.subr.mxu0 0.0
        %780 = vmatpush1.msra.mxu0 %v461
        %781 = vmatprep.subr.mxu0 0.0
        %782 = vmatpush1.msra.mxu0 %v460
        %783 = vmatprep.subr.mxu0 0.0
        %784 = vmatpush1.msra.mxu0 %v459
        %785 = vmatprep.subr.mxu0 0.0
        %786 = vmatpush1.msra.mxu0 %v458
        %787 = vmatprep.subr.mxu0 0.0
        %788 = vmatpush1.msra.mxu0 %v457
        %789 = vmatprep.subr.mxu0 0.0
        %790 = vmatpush1.msra.mxu0 %v456
        %791 = vmatprep.subr.mxu0 0.0
        %792 = vmatpush1.msra.mxu0 %v455
        %793 = vmatprep.subr.mxu0 0.0
        %794 = vmatpush1.msra.mxu0 %v454
        %795 = vmatprep.subr.mxu0 0.0
        %796 = vmatpush1.msra.mxu0 %v453
        %797 = vmatprep.subr.mxu0 0.0
        %798 = vmatpush1.msra.mxu0 %v452
        %799 = vmatprep.subr.mxu0 0.0
        %800 = vmatpush1.msra.mxu0 %v451
        %801 = vmatprep.subr.mxu0 0.0
        %802 = vmatpush1.msra.mxu0 %v450
        %803 = vmatprep.subr.mxu0 0.0
        %804 = vmatpush1.msra.mxu0 %v449
        %805 = vmatprep.subr.mxu0 0.0
        %806 = vmatpush2.msra.mxu0 0.0
        %807 = vmatprep.subr.mxu0 0.0
        %808 = vmatpush2.msra.mxu0 0.0
        %809 = vmatprep.subr.mxu0 0.0
        %810 = vmatpush2.msra.mxu0 0.0
        %811 = vmatprep.subr.mxu0 0.0
        %812 = vmatpush2.msra.mxu0 0.0
        %813 = vmatprep.subr.mxu0 0.0
        %814 = vmatpush2.msra.mxu0 0.0
        %815 = vmatprep.subr.mxu0 0.0
        %816 = vmatpush2.msra.mxu0 0.0
        %817 = vmatprep.subr.mxu0 0.0
        %818 = vmatpush2.msra.mxu0 0.0
        %819 = vmatprep.subr.mxu0 0.0
        %820 = vmatpush2.msra.mxu0 0.0
        %821 = vmatprep.subr.mxu0 0.0
        %822 = vmatpush2.msra.mxu0 0.0
        %823 = vmatprep.subr.mxu0 0.0
        %824 = vmatpush2.msra.mxu0 0.0
        %825 = vmatprep.subr.mxu0 0.0
        %826 = vmatpush2.msra.mxu0 0.0
        %827 = vmatprep.subr.mxu0 0.0
        %828 = vmatpush2.msra.mxu0 0.0
        %829 = vmatprep.subr.mxu0 0.0
        %830 = vmatpush2.msra.mxu0 0.0
        %831 = vmatprep.subr.mxu0 0.0
        %832 = vmatpush2.msra.mxu0 0.0
        %833 = vmatprep.subr.mxu0 0.0
        %834 = vmatpush2.msra.mxu0 0.0
        %835 = vmatprep.subr.mxu0 0.0
        %836 = vmatpush2.msra.mxu0 0.0
        %837 = vmatprep.mubr.f32.mxu0 0.0
        %838 = vmatmul.mubr.f32.gmra.mxu0 %v702
        %v839 = vpop.f32.mrf.mxu0
        %v840 = vadd.f32 %v770, %v839
        %v841 = vpop.f32.mrf.mxu0
        %842 = vdwg.mxu0
        %v843 = vadd.f32 %v840, %v355
        %v844 = vmax.f32 %v843, 0.0
        %s845 = sadd.s32 %s357, 1
        %p846 = scmp.lt.s32.totalorder %s845, 8
        %s847 = scalar_select %p846, 1, 0
        %v848 = vstv %s847
        %vm849 = vcmp.eq.s32.totalorder %v848, 1
        %v850 = vsel %vm849, %v702, %v627
        %v851 = vsel %vm849, %v844, %v628
        %s852 = scalar_lea.vmem %s301, 4 [#allocation4]
        %v853 = vld [vmem:[%s852] sm:$0x3]
        %854 = vmatprep.subr.mxu0 0.0
        %855 = vmatpush1.msra.mxu0 %v376
        %856 = vmatprep.subr.mxu0 0.0
        %857 = vmatpush1.msra.mxu0 %v375
        %858 = vmatprep.subr.mxu0 0.0
        %859 = vmatpush1.msra.mxu0 %v374
        %860 = vmatprep.subr.mxu0 0.0
        %861 = vmatpush1.msra.mxu0 %v373
        %862 = vmatprep.subr.mxu0 0.0
        %863 = vmatpush1.msra.mxu0 %v372
        %864 = vmatprep.subr.mxu0 0.0
        %865 = vmatpush1.msra.mxu0 %v371
        %866 = vmatprep.subr.mxu0 0.0
        %867 = vmatpush1.msra.mxu0 %v370
        %868 = vmatprep.subr.mxu0 0.0
        %869 = vmatpush1.msra.mxu0 %v369
        %870 = vmatprep.subr.mxu0 0.0
        %871 = vmatpush1.msra.mxu0 %v368
        %872 = vmatprep.subr.mxu0 0.0
        %873 = vmatpush1.msra.mxu0 %v367
        %874 = vmatprep.subr.mxu0 0.0
        %875 = vmatpush1.msra.mxu0 %v366
        %876 = vmatprep.subr.mxu0 0.0
        %877 = vmatpush1.msra.mxu0 %v365
        %878 = vmatprep.subr.mxu0 0.0
        %879 = vmatpush1.msra.mxu0 %v364
        %880 = vmatprep.subr.mxu0 0.0
        %881 = vmatpush1.msra.mxu0 %v363
        %882 = vmatprep.subr.mxu0 0.0
        %883 = vmatpush1.msra.mxu0 %v362
        %884 = vmatprep.subr.mxu0 0.0
        %885 = vmatpush1.msra.mxu0 %v361
        %886 = vmatprep.subr.mxu0 0.0
        %887 = vmatpush2.msra.mxu0 0.0
        %888 = vmatprep.subr.mxu0 0.0
        %889 = vmatpush2.msra.mxu0 0.0
        %890 = vmatprep.subr.mxu0 0.0
        %891 = vmatpush2.msra.mxu0 0.0
        %892 = vmatprep.subr.mxu0 0.0
        %893 = vmatpush2.msra.mxu0 0.0
        %894 = vmatprep.subr.mxu0 0.0
        %895 = vmatpush2.msra.mxu0 0.0
        %896 = vmatprep.subr.mxu0 0.0
        %897 = vmatpush2.msra.mxu0 0.0
        %898 = vmatprep.subr.mxu0 0.0
        %899 = vmatpush2.msra.mxu0 0.0
        %900 = vmatprep.subr.mxu0 0.0
        %901 = vmatpush2.msra.mxu0 0.0
        %902 = vmatprep.subr.mxu0 0.0
        %903 = vmatpush2.msra.mxu0 0.0
        %904 = vmatprep.subr.mxu0 0.0
        %905 = vmatpush2.msra.mxu0 0.0
        %906 = vmatprep.subr.mxu0 0.0
        %907 = vmatpush2.msra.mxu0 0.0
        %908 = vmatprep.subr.mxu0 0.0
        %909 = vmatpush2.msra.mxu0 0.0
        %910 = vmatprep.subr.mxu0 0.0
        %911 = vmatpush2.msra.mxu0 0.0
        %912 = vmatprep.subr.mxu0 0.0
        %913 = vmatpush2.msra.mxu0 0.0
        %914 = vmatprep.subr.mxu0 0.0
        %915 = vmatpush2.msra.mxu0 0.0
        %916 = vmatprep.subr.mxu0 0.0
        %917 = vmatpush2.msra.mxu0 0.0
        %918 = vmatprep.mubr.f32.mxu0 0.0
        %919 = vmatmul.mubr.f32.gmra.mxu0 %v850
        %v920 = vpop.f32.mrf.mxu0
        %v921 = vadd.f32 0.0, %v920
        %v922 = vpop.f32.mrf.mxu0
        %923 = vdwg.mxu0
        %v924 = vadd.f32 %v853, %v921
        %v925 = vmax.f32 %v924, 0.0
        %926 = vmatprep.subr.mxu0 0.0
        %927 = vmatpush1.msra.mxu0 %v480
        %928 = vmatprep.subr.mxu0 0.0
        %929 = vmatpush1.msra.mxu0 %v479
        %930 = vmatprep.subr.mxu0 0.0
        %931 = vmatpush1.msra.mxu0 %v478
        %932 = vmatprep.subr.mxu0 0.0
        %933 = vmatpush1.msra.mxu0 %v477
        %934 = vmatprep.subr.mxu0 0.0
        %935 = vmatpush1.msra.mxu0 %v476
        %936 = vmatprep.subr.mxu0 0.0
        %937 = vmatpush1.msra.mxu0 %v475
        %938 = vmatprep.subr.mxu0 0.0
        %939 = vmatpush1.msra.mxu0 %v474
        %940 = vmatprep.subr.mxu0 0.0
        %941 = vmatpush1.msra.mxu0 %v473
        %942 = vmatprep.subr.mxu0 0.0
        %943 = vmatpush1.msra.mxu0 %v472
        %944 = vmatprep.subr.mxu0 0.0
        %945 = vmatpush1.msra.mxu0 %v471
        %946 = vmatprep.subr.mxu0 0.0
        %947 = vmatpush1.msra.mxu0 %v470
        %948 = vmatprep.subr.mxu0 0.0
        %949 = vmatpush1.msra.mxu0 %v469
        %950 = vmatprep.subr.mxu0 0.0
        %951 = vmatpush1.msra.mxu0 %v468
        %952 = vmatprep.subr.mxu0 0.0
        %953 = vmatpush1.msra.mxu0 %v467
        %954 = vmatprep.subr.mxu0 0.0
        %955 = vmatpush1.msra.mxu0 %v466
        %956 = vmatprep.subr.mxu0 0.0
        %957 = vmatpush1.msra.mxu0 %v465
        %958 = vmatprep.subr.mxu0 0.0
        %959 = vmatpush2.msra.mxu0 0.0
        %960 = vmatprep.subr.mxu0 0.0
        %961 = vmatpush2.msra.mxu0 0.0
        %962 = vmatprep.subr.mxu0 0.0
        %963 = vmatpush2.msra.mxu0 0.0
        %964 = vmatprep.subr.mxu0 0.0
        %965 = vmatpush2.msra.mxu0 0.0
        %966 = vmatprep.subr.mxu0 0.0
        %967 = vmatpush2.msra.mxu0 0.0
        %968 = vmatprep.subr.mxu0 0.0
        %969 = vmatpush2.msra.mxu0 0.0
        %970 = vmatprep.subr.mxu0 0.0
        %971 = vmatpush2.msra.mxu0 0.0
        %972 = vmatprep.subr.mxu0 0.0
        %973 = vmatpush2.msra.mxu0 0.0
        %974 = vmatprep.subr.mxu0 0.0
        %975 = vmatpush2.msra.mxu0 0.0
        %976 = vmatprep.subr.mxu0 0.0
        %977 = vmatpush2.msra.mxu0 0.0
        %978 = vmatprep.subr.mxu0 0.0
        %979 = vmatpush2.msra.mxu0 0.0
        %980 = vmatprep.subr.mxu0 0.0
        %981 = vmatpush2.msra.mxu0 0.0
        %982 = vmatprep.subr.mxu0 0.0
        %983 = vmatpush2.msra.mxu0 0.0
        %984 = vmatprep.subr.mxu0 0.0
        %985 = vmatpush2.msra.mxu0 0.0
        %986 = vmatprep.subr.mxu0 0.0
        %987 = vmatpush2.msra.mxu0 0.0
        %988 = vmatprep.subr.mxu0 0.0
        %989 = vmatpush2.msra.mxu0 0.0
        %990 = vmatprep.mubr.f32.mxu0 0.0
        %991 = vmatmul.mubr.f32.gmra.mxu0 %v851
        %v992 = vpop.f32.mrf.mxu0
        %v993 = vadd.f32 0.0, %v992
        %v994 = vpop.f32.mrf.mxu0
        %995 = vdwg.mxu0
        %996 = vmatprep.subr.mxu0 0.0
        %997 = vmatpush1.msra.mxu0 %v464
        %998 = vmatprep.subr.mxu0 0.0
        %999 = vmatpush1.msra.mxu0 %v463
        %1000 = vmatprep.subr.mxu0 0.0
        %1001 = vmatpush1.msra.mxu0 %v462
        %1002 = vmatprep.subr.mxu0 0.0
        %1003 = vmatpush1.msra.mxu0 %v461
        %1004 = vmatprep.subr.mxu0 0.0
        %1005 = vmatpush1.msra.mxu0 %v460
        %1006 = vmatprep.subr.mxu0 0.0
        %1007 = vmatpush1.msra.mxu0 %v459
        %1008 = vmatprep.subr.mxu0 0.0
        %1009 = vmatpush1.msra.mxu0 %v458
        %1010 = vmatprep.subr.mxu0 0.0
        %1011 = vmatpush1.msra.mxu0 %v457
        %1012 = vmatprep.subr.mxu0 0.0
        %1013 = vmatpush1.msra.mxu0 %v456
        %1014 = vmatprep.subr.mxu0 0.0
        %1015 = vmatpush1.msra.mxu0 %v455
        %1016 = vmatprep.subr.mxu0 0.0
        %1017 = vmatpush1.msra.mxu0 %v454
        %1018 = vmatprep.subr.mxu0 0.0
        %1019 = vmatpush1.msra.mxu0 %v453
        %1020 = vmatprep.subr.mxu0 0.0
        %1021 = vmatpush1.msra.mxu0 %v452
        %1022 = vmatprep.subr.mxu0 0.0
        %1023 = vmatpush1.msra.mxu0 %v451
        %1024 = vmatprep.subr.mxu0 0.0
        %1025 = vmatpush1.msra.mxu0 %v450
        %1026 = vmatprep.subr.mxu0 0.0
        %1027 = vmatpush1.msra.mxu0 %v449
        %1028 = vmatprep.subr.mxu0 0.0
        %1029 = vmatpush2.msra.mxu0 0.0
        %1030 = vmatprep.subr.mxu0 0.0
        %1031 = vmatpush2.msra.mxu0 0.0
        %1032 = vmatprep.subr.mxu0 0.0
        %1033 = vmatpush2.msra.mxu0 0.0
        %1034 = vmatprep.subr.mxu0 0.0
        %1035 = vmatpush2.msra.mxu0 0.0
        %1036 = vmatprep.subr.mxu0 0.0
        %1037 = vmatpush2.msra.mxu0 0.0
        %1038 = vmatprep.subr.mxu0 0.0
        %1039 = vmatpush2.msra.mxu0 0.0
        %1040 = vmatprep.subr.mxu0 0.0
        %1041 = vmatpush2.msra.mxu0 0.0
        %1042 = vmatprep.subr.mxu0 0.0
        %1043 = vmatpush2.msra.mxu0 0.0
        %1044 = vmatprep.subr.mxu0 0.0
        %1045 = vmatpush2.msra.mxu0 0.0
        %1046 = vmatprep.subr.mxu0 0.0
        %1047 = vmatpush2.msra.mxu0 0.0
        %1048 = vmatprep.subr.mxu0 0.0
        %1049 = vmatpush2.msra.mxu0 0.0
        %1050 = vmatprep.subr.mxu0 0.0
        %1051 = vmatpush2.msra.mxu0 0.0
        %1052 = vmatprep.subr.mxu0 0.0
        %1053 = vmatpush2.msra.mxu0 0.0
        %1054 = vmatprep.subr.mxu0 0.0
        %1055 = vmatpush2.msra.mxu0 0.0
        %1056 = vmatprep.subr.mxu0 0.0
        %1057 = vmatpush2.msra.mxu0 0.0
        %1058 = vmatprep.subr.mxu0 0.0
        %1059 = vmatpush2.msra.mxu0 0.0
        %1060 = vmatprep.mubr.f32.mxu0 0.0
        %1061 = vmatmul.mubr.f32.gmra.mxu0 %v925
        %v1062 = vpop.f32.mrf.mxu0
        %v1063 = vadd.f32 %v993, %v1062
        %v1064 = vpop.f32.mrf.mxu0
        %1065 = vdwg.mxu0
        %v1066 = vadd.f32 %v1063, %v355
        %v1067 = vmax.f32 %v1066, 0.0
        %s1068 = sadd.s32 %s357, 2
        %p1069 = scmp.lt.s32.totalorder %s1068, 8
        %s1070 = scalar_select %p1069, 1, 0
        %v1071 = vstv %s1070
        %vm1072 = vcmp.eq.s32.totalorder %v1071, 1
        %v1073 = vsel %vm1072, %v925, %v850
        %v1074 = vsel %vm1072, %v1067, %v851
        %1075 = vst [vmem:[#allocation2] sm:$0x3] %v1073
        %1076 = vst [vmem:[#allocation3] sm:$0x3] %v1074
        %p1077 = scmp.eq.s32.totalorder %s24, 2
        // Predicated region
        $region73: #{tpu_custom_call.1} parent=47 // pred_check
          %p1078 = pneg %p1077
        $region74: #{tpu_custom_call.1} parent=47 // pred_check_branch
          %1080 = sbr.rel (%p1078) target = $region76
        $region75: #{tpu_custom_call.1} parent=47 // pred_region
          %v1081 = vld [vmem:[#allocation12] sm:$0xff]
          %v1082 = vld [vmem:[#allocation12 + $0x8] sm:$0xff]
          %v1083 = vld [vmem:[#allocation12 + $0x10] sm:$0xff]
          %v1084 = vld [vmem:[#allocation12 + $0x18] sm:$0xff]
          %v1085 = vld [vmem:[#allocation12 + $0x20] sm:$0xff]
          %v1086 = vld [vmem:[#allocation12 + $0x28] sm:$0xff]
          %v1087 = vld [vmem:[#allocation12 + $0x30] sm:$0xff]
          %v1088 = vld [vmem:[#allocation12 + $0x38] sm:$0xff]
          %v1089 = vld [vmem:[#allocation12 + $0x40] sm:$0xff]
          %v1090 = vld [vmem:[#allocation12 + $0x48] sm:$0xff]
          %v1091 = vld [vmem:[#allocation12 + $0x50] sm:$0xff]
          %v1092 = vld [vmem:[#allocation12 + $0x58] sm:$0xff]
          %v1093 = vld [vmem:[#allocation12 + $0x60] sm:$0xff]
          %v1094 = vld [vmem:[#allocation12 + $0x68] sm:$0xff]
          %v1095 = vld [vmem:[#allocation12 + $0x70] sm:$0xff]
          %v1096 = vld [vmem:[#allocation12 + $0x78] sm:$0xff]
          %v1097 = vld [vmem:[%s6] sm:$0x1]
          %v1099 = vlaneseq
          %v1100 = vshrl.u32 %v1099, 7
          %v1101 = vsub.s32 0, %v1100
          %v1102 = vrot.slane %v1097, %v1101
          %1104 = vmatprep.subr.mxu0 0.0
          %1105 = vmatpush1.msra.mxu0 %v1096
          %1106 = vmatprep.subr.mxu0 0.0
          %1107 = vmatpush1.msra.mxu0 %v1095
          %1108 = vmatprep.subr.mxu0 0.0
          %1109 = vmatpush1.msra.mxu0 %v1094
          %1110 = vmatprep.subr.mxu0 0.0
          %1111 = vmatpush1.msra.mxu0 %v1093
          %1112 = vmatprep.subr.mxu0 0.0
          %1113 = vmatpush1.msra.mxu0 %v1092
          %1114 = vmatprep.subr.mxu0 0.0
          %1115 = vmatpush1.msra.mxu0 %v1091
          %1116 = vmatprep.subr.mxu0 0.0
          %1117 = vmatpush1.msra.mxu0 %v1090
          %1118 = vmatprep.subr.mxu0 0.0
          %1119 = vmatpush1.msra.mxu0 %v1089
          %1120 = vmatprep.subr.mxu0 0.0
          %1121 = vmatpush1.msra.mxu0 %v1088
          %1122 = vmatprep.subr.mxu0 0.0
          %1123 = vmatpush1.msra.mxu0 %v1087
          %1124 = vmatprep.subr.mxu0 0.0
          %1125 = vmatpush1.msra.mxu0 %v1086
          %1126 = vmatprep.subr.mxu0 0.0
          %1127 = vmatpush1.msra.mxu0 %v1085
          %1128 = vmatprep.subr.mxu0 0.0
          %1129 = vmatpush1.msra.mxu0 %v1084
          %1130 = vmatprep.subr.mxu0 0.0
          %1131 = vmatpush1.msra.mxu0 %v1083
          %1132 = vmatprep.subr.mxu0 0.0
          %1133 = vmatpush1.msra.mxu0 %v1082
          %1134 = vmatprep.subr.mxu0 0.0
          %1135 = vmatpush1.msra.mxu0 %v1081
          %1136 = vmatprep.subr.mxu0 0.0
          %1137 = vmatpush2.msra.mxu0 0.0
          %1138 = vmatprep.subr.mxu0 0.0
          %1139 = vmatpush2.msra.mxu0 0.0
          %1140 = vmatprep.subr.mxu0 0.0
          %1141 = vmatpush2.msra.mxu0 0.0
          %1142 = vmatprep.subr.mxu0 0.0
          %1143 = vmatpush2.msra.mxu0 0.0
          %1144 = vmatprep.subr.mxu0 0.0
          %1145 = vmatpush2.msra.mxu0 0.0
          %1146 = vmatprep.subr.mxu0 0.0
          %1147 = vmatpush2.msra.mxu0 0.0
          %1148 = vmatprep.subr.mxu0 0.0
          %1149 = vmatpush2.msra.mxu0 0.0
          %1150 = vmatprep.subr.mxu0 0.0
          %1151 = vmatpush2.msra.mxu0 0.0
          %1152 = vmatprep.subr.mxu0 0.0
          %1153 = vmatpush2.msra.mxu0 0.0
          %1154 = vmatprep.subr.mxu0 0.0
          %1155 = vmatpush2.msra.mxu0 0.0
          %1156 = vmatprep.subr.mxu0 0.0
          %1157 = vmatpush2.msra.mxu0 0.0
          %1158 = vmatprep.subr.mxu0 0.0
          %1159 = vmatpush2.msra.mxu0 0.0
          %1160 = vmatprep.subr.mxu0 0.0
          %1161 = vmatpush2.msra.mxu0 0.0
          %1162 = vmatprep.subr.mxu0 0.0
          %1163 = vmatpush2.msra.mxu0 0.0
          %1164 = vmatprep.subr.mxu0 0.0
          %1165 = vmatpush2.msra.mxu0 0.0
          %1166 = vmatprep.subr.mxu0 0.0
          %1167 = vmatpush2.msra.mxu0 0.0
          %1168 = vmatprep.mubr.f32.mxu0 0.0
          %1169 = vmatmul.mubr.f32.gmra.mxu0 %v1074
          %v1170 = vpop.f32.mrf.mxu0
          %v1171 = vadd.f32 %v1102, %v1170
          %v1172 = vpop.f32.mrf.mxu0
          %1173 = vdwg.mxu0
          %1174 = vst [vmem:[#allocation13] sm:$0x3] %v1171
        $region76: #{tpu_custom_call.1} parent=47 // pred_fallthru
          _
        // Predicated region
        $region77: #{tpu_custom_call.1} parent=47 // pred_check
          %p1175 = pneg %p189
        $region78: #{tpu_custom_call.1} parent=47 // pred_check_branch
          %1177 = sbr.rel (%p1175) target = $region80
        $region79: #{tpu_custom_call.1} parent=47 // pred_region
          %s1179 = ssub.s32 32, 32
          %1180 = vsyncadd [#allocation6], %s1179
          %s1182 = sshll.u32 [#allocation13], 4
          %s1183 = int_to_ptr.vmem [resolvable:$true] %s1182
          %1185 = dma.vmem_to_hbm [thread:$0]  %s1183, 32, %s7, [#allocation6]
        $region80: #{tpu_custom_call.1} parent=47 // pred_fallthru
          _
        // Predicated region
        $region81: #{tpu_custom_call.1} parent=47 // pred_check
          %p1186 = pneg %p189
        $region82: #{tpu_custom_call.1} parent=47 // pred_check_branch
          %1188 = sbr.rel (%p1186) target = $region84
        $region83: #{tpu_custom_call.1} parent=47 // pred_region
          %1189 = dma.done [#allocation6], 32
        $region84: #{tpu_custom_call.1} parent=47 // pred_fallthru
          _
      $region48: #{tpu_custom_call.1} parent=5 // pred_fallthru
        _
      %p1190 = scmp.le.s32.totalorder 2, %s19
      // Predicated region
      $region85: #{tpu_custom_call.1} parent=5 // pred_check
        %p1191 = pneg %p1190
      $region86: #{tpu_custom_call.1} parent=5 // pred_check_branch
        %1193 = sbr.rel (%p1191) target = $region88
      $region87: #{tpu_custom_call.1} parent=5 // pred_region
        %s1194 = ssub.s32 %s19, 2
      $region88: #{tpu_custom_call.1} parent=5 // pred_fallthru
        _
    $region6: #{tpu_custom_call.1} parent=1 // loop_footer
      %s23 = sadd.s32 1, %s19
    $region7: #{tpu_custom_call.1} parent=1 // loop_footer_branch
      %18 = sbr.rel target = $region3
    $region8: #{tpu_custom_call.1} parent=1 // loop_exit
      _
    %1195 = vsyncpa [#allocation5], 1
    %s1196 = scalar_lea.sflag [#allocation5], 1
    %1197 = vsyncpa %s1196, 1
    %1198 = vsyncpa [#allocation8], 1
    %1199 = vsyncpa [#allocation11], 1
    %1200 = vsyncpa [#allocation6], 1
    %s1201 = scalar_lea.sflag [#allocation6], 1
    %1202 = vsyncpa %s1201, 1

</llo_original>
